<compile_context>
chip_gen: v5e
topology: v5e:2x2
jax: 0.10.0
libtpu: 0.0.40
codegen_flags: <defaults>
</compile_context>

<pallas_src>
import functools

import jax
import jax.numpy as jnp
from jax import lax
from jax.experimental import pallas as pl
from jax.experimental.pallas import tpu as pltpu

_LANES = 128


def _round_up(x, m):
    return (x + m - 1) // m * m


def _pick_row_tile(hout, wout, target):
    """Largest divisor of hout <= target, preferring tr*wout % 8 == 0."""
    best = None
    for t in range(min(target, hout), 0, -1):
        if hout % t == 0:
            if best is None:
                best = t
            if (t * wout) % 8 == 0:
                return t
    return best


# ------------------------------ fused kernel --------------------------------

def _bottleneck_kernel(x_ref, w1_ref, b1_ref, w2_ref, b2_ref, w3_ref, b3_ref,
                       o_ref, h1_scr, *, stride, w, tr, l_in, wout, wpad,
                       has_residual, zero_bottom_idx):
    """One (batch, output-row-tile) step of the fused inverted residual.

    x_ref : (1, H+2, Wp, Cin_p)    spatially pre-padded (halo=1, width padded
                                   to a multiple of 8), channel-padded, f32.
                                   Block index only depends on the batch axis,
                                   so it is DMA'd once per batch.
    o_ref : (1, TR*Wout, Cout_p)   flattened output row tile (lane+sublane
                                   dense stores).
    h1_scr: (L_in, Wp, Cexp_p)     expanded activation tile (VMEM only, f32).
    """
    r = pl.program_id(1)
    p0 = r * (tr * stride)                  # first padded row this tile needs
    if (tr * stride) % 8 == 0:
        p0 = pl.multiple_of(p0, 8)

    cin_p = x_ref.shape[-1]
    cexp_p = w1_ref.shape[-1]
    cout_p = w3_ref.shape[-1]

    # ---- stage 1: 1x1 expand (BN folded into w1/b1, bf16 MXU) + ReLU6 ------
    xw = x_ref[0, pl.ds(p0, l_in), :, :]                 # (L_in, Wp, Cin_p) f32
    lhs = xw.reshape(l_in * wpad, cin_p).astype(jnp.bfloat16)   # free reshape
    h1 = jnp.dot(lhs, w1_ref[...], preferred_element_type=jnp.float32)
    h1 = jnp.clip(h1 + b1_ref[...], 0.0, 6.0)
    h1_scr[...] = h1.reshape(l_in, wpad, cexp_p)

    # The 3x3 depthwise conv zero-pads its *input* (= the expanded map), so the
    # border positions must be exactly zero (clip(b1, 0, 6) is not zero).
    # Columns beyond w+1 (alignment padding) are never read by the taps.
    col_zeros = jnp.zeros((l_in, 1, cexp_p), jnp.float32)
    h1_scr[:, pl.ds(0, 1), :] = col_zeros
    h1_scr[:, pl.ds(w + 1, 1), :] = col_zeros

    @pl.when(r == 0)
    def _():                                               # top padded row
        h1_scr[pl.ds(0, 1), :, :] = jnp.zeros((1, wpad, cexp_p), jnp.float32)

    if zero_bottom_idx is not None:                        # bottom padded row
        @pl.when(r == pl.num_programs(1) - 1)
        def _():
            h1_scr[pl.ds(zero_bottom_idx, 1), :, :] = jnp.zeros(
                (1, wpad, cexp_p), jnp.float32)

    # ---- stage 2: 3x3 depthwise (BN folded into w2/b2, f32 VPU) + ReLU6 ----
    acc = jnp.zeros((tr, wout, cexp_p), jnp.float32)
    for kh in range(3):
        for kw in range(3):
            if stride == 1:
                tap = h1_scr[pl.ds(kh, tr), pl.ds(kw, wout), :]
            else:
                tap = h1_scr[pl.ds(kh, tr, stride=stride),
                             pl.ds(kw, wout, stride=stride), :]
            acc = acc + tap * w2_ref[kh, kw:kw + 1, :]
    h2 = jnp.clip(acc + b2_ref[...], 0.0, 6.0)

    # ---- stage 3: 1x1 project (BN folded into w3/b3, bf16 MXU) (+residual) -
    out = jnp.dot(h2.reshape(tr * wout, cexp_p).astype(jnp.bfloat16),
                  w3_ref[...], preferred_element_type=jnp.float32)
    out = out + b3_ref[...]
    if has_residual:
        # stride == 1 here, so Wout == W and output rows map 1:1 to input rows
        res = x_ref[0, pl.ds(p0 + 1, tr), pl.ds(1, wout), :]
        out = out + res.reshape(tr * wout, cin_p)
    o_ref[...] = out.reshape(1, tr * wout, cout_p).astype(o_ref.dtype)


# ------------------------------ pallas wrapper -------------------------------

def _fused_bottleneck(xp, w1, b1, w2, b2, w3, b3, *, stride, h, w, hout, wout,
                      tr, has_residual):
    n, hp, wp, cin_p = xp.shape
    cexp_p = w1.shape[1]
    cout_p = w3.shape[1]
    l_in = (tr - 1) * stride + 3            # padded input rows per output tile
    r_tiles = hout // tr

    # Does the last tile read the bottom padded row (index h+1)?  Static.
    p0_last = (r_tiles - 1) * tr * stride
    reads_bottom = (p0_last + l_in - 1) >= (h + 1)
    zero_bottom_idx = (h + 1 - p0_last) if reads_bottom else None

    kernel = functools.partial(
        _bottleneck_kernel, stride=stride, w=w, tr=tr, l_in=l_in, wout=wout,
        wpad=wp, has_residual=has_residual, zero_bottom_idx=zero_bottom_idx)

    flops = int(2 * n * r_tiles * l_in * wp * cin_p * cexp_p    # expand
                + 18 * n * hout * wout * cexp_p                 # depthwise
                + 2 * n * hout * wout * cexp_p * cout_p)        # project
    bytes_accessed = int(4 * xp.size + 4 * n * hout * wout * cout_p
                         + 2 * (w1.size + w3.size) + 4 * w2.size)

    grid_spec = pltpu.PrefetchScalarGridSpec(
        num_scalar_prefetch=0,
        grid=(n, r_tiles),
        in_specs=[
            pl.BlockSpec((1, hp, wp, cin_p), lambda b, r: (b, 0, 0, 0)),
            pl.BlockSpec((cin_p, cexp_p), lambda b, r: (0, 0)),
            pl.BlockSpec((1, cexp_p), lambda b, r: (0, 0)),
            pl.BlockSpec((3, 3, cexp_p), lambda b, r: (0, 0, 0)),
            pl.BlockSpec((1, cexp_p), lambda b, r: (0, 0)),
            pl.BlockSpec((cexp_p, cout_p), lambda b, r: (0, 0)),
            pl.BlockSpec((1, cout_p), lambda b, r: (0, 0)),
        ],
        out_specs=pl.BlockSpec((1, tr * wout, cout_p),
                               lambda b, r: (b, r, 0)),
        scratch_shapes=[pltpu.VMEM((l_in, wp, cexp_p), jnp.float32)],
    )

    return pl.pallas_call(
        kernel,
        out_shape=jax.ShapeDtypeStruct((n, hout * wout, cout_p), jnp.float32),
        grid_spec=grid_spec,
        compiler_params=pltpu.CompilerParams(
            dimension_semantics=("parallel", "parallel"),
            vmem_limit_bytes=48 * 1024 * 1024),
        cost_estimate=pl.CostEstimate(flops=flops, transcendentals=0,
                                      bytes_accessed=bytes_accessed),
    )(xp, w1, b1, w2, b2, w3, b3)


def linear_bottleneck_forward(x_nchw, prepared, *, stride, inplanes, outplanes,
                              row_tile_target=16):
    n, c, h, w = x_nchw.shape
    assert c == inplanes
    cin_p = prepared["w1"].shape[0]
    cout_p = prepared["w3"].shape[1]

    # NCHW -> NHWC boundary glue (channels on the lane axis inside the kernel).
    x = jnp.transpose(x_nchw, (0, 2, 3, 1))
    # Spatial halo of 1, width rounded up to a multiple of 8 (extra columns are
    # never read by the depthwise taps), channels zero-padded to 128 lanes --
    # only on the SMALL Cin tensor; the expanded tensor never hits HBM.
    wp = _round_up(w + 2, 8)
    xp = jnp.pad(x, ((0, 0), (1, 1), (1, wp - w - 1), (0, cin_p - inplanes)))

    hout = (h - 1) // stride + 1
    wout = (w - 1) // stride + 1
    tr = _pick_row_tile(hout, wout, row_tile_target)
    if (tr * wout) % 8 != 0:        # keep the output block sublane-aligned
        tr = hout
    has_residual = (stride == 1 and inplanes == outplanes)
    if has_residual:
        assert cin_p == cout_p, "residual path needs matching padded widths"

    out_p = _fused_bottleneck(
        xp, prepared["w1"], prepared["b1"], prepared["w2"], prepared["b2"],
        prepared["w3"], prepared["b3"], stride=stride, h=h, w=w, hout=hout,
        wout=wout, tr=tr, has_residual=has_residual)

    out = out_p.reshape(n, hout, wout, cout_p)[..., :outplanes]
    return jnp.transpose(out, (0, 3, 1, 2))          # NHWC -> NCHW


# ------------------------------- parameters ----------------------------------

def make_params(key, inplanes, outplanes, t):
    """Raw parameters (conv weights + BN scale/bias in inference form)."""
    cexp = inplanes * t
    keys = jax.random.split(key, 16)

    def bn_fold(kg, kb, km, kv, c):
        gamma = 1.0 + 0.1 * jax.random.normal(kg, (c,), jnp.float32)
        beta = 0.1 * jax.random.normal(kb, (c,), jnp.float32)
        mean = 0.1 * jax.random.normal(km, (c,), jnp.float32)
        var = 1.0 + jnp.abs(jax.random.normal(kv, (c,), jnp.float32))
        scale = gamma / jnp.sqrt(var + 1e-5)
        bias = beta - mean * scale
        return scale, bias

    w1 = 0.1 * jax.random.normal(keys[0], (inplanes, cexp), jnp.float32)
    w2 = 0.1 * jax.random.normal(keys[1], (3, 3, cexp), jnp.float32)
    w3 = 0.1 * jax.random.normal(keys[2], (cexp, outplanes), jnp.float32)
    s1, b1 = bn_fold(keys[3], keys[4], keys[5], keys[6], cexp)
    s2, b2 = bn_fold(keys[7], keys[8], keys[9], keys[10], cexp)
    s3, b3 = bn_fold(keys[11], keys[12], keys[13], keys[14], outplanes)
    return {"w1": w1, "s1": s1, "b1": b1,
            "w2": w2, "s2": s2, "b2": b2,
            "w3": w3, "s3": s3, "b3": b3}


def prepare_params(p, *, inplanes, outplanes):
    """Fold BN scales into conv weights, pad channels to 128 lanes, store the
    1x1 conv weights in bf16 (MXU-native); depthwise weights/biases stay f32."""
    cexp = p["w1"].shape[1]
    cin_p = _round_up(inplanes, _LANES)
    cexp_p = _round_up(cexp, _LANES)
    cout_p = _round_up(outplanes, _LANES)

    w1 = p["w1"] * p["s1"][None, :]
    w2 = p["w2"] * p["s2"][None, None, :]
    w3 = p["w3"] * p["s3"][None, :]

    w1p = jnp.zeros((cin_p, cexp_p), jnp.float32).at[:inplanes, :cexp].set(w1)
    b1p = jnp.zeros((1, cexp_p), jnp.float32).at[0, :cexp].set(p["b1"])
    w2p = jnp.zeros((3, 3, cexp_p), jnp.float32).at[:, :, :cexp].set(w2)
    b2p = jnp.zeros((1, cexp_p), jnp.float32).at[0, :cexp].set(p["b2"])
    w3p = jnp.zeros((cexp_p, cout_p), jnp.float32).at[:cexp, :outplanes].set(w3)
    b3p = jnp.zeros((1, cout_p), jnp.float32).at[0, :outplanes].set(p["b3"])
    return {"w1": w1p.astype(jnp.bfloat16), "b1": b1p,
            "w2": w2p, "b2": b2p,
            "w3": w3p.astype(jnp.bfloat16), "b3": b3p}


# --------------------------- pure-JAX references ------------------------------

def _reference(x_nchw, p, *, stride, inplanes, outplanes):
    """True module semantics (f32 everywhere, BN as separate scale/bias)."""
    x = jnp.transpose(x_nchw, (0, 2, 3, 1))
    h1 = jnp.einsum("nhwc,cd->nhwd", x, p["w1"])
    h1 = jnp.clip(h1 * p["s1"] + p["b1"], 0.0, 6.0)
    w2 = p["w2"][:, :, None, :]                           # HWIO depthwise
    h2 = lax.conv_general_dilated(
        h1, w2, window_strides=(stride, stride), padding=((1, 1), (1, 1)),
        dimension_numbers=("NHWC", "HWIO", "NHWC"),
        feature_group_count=h1.shape[-1])
    h2 = jnp.clip(h2 * p["s2"] + p["b2"], 0.0, 6.0)
    out = jnp.einsum("nhwc,cd->nhwd", h2, p["w3"]) * p["s3"] + p["b3"]
    if stride == 1 and inplanes == outplanes:
        out = out + x
    return jnp.transpose(out, (0, 3, 1, 2))


def _reference_prepared(x_nchw, pp, *, stride, inplanes, outplanes):
    """Apples-to-apples reference using the same folded/padded bf16 weights."""
    cin_p = pp["w1"].shape[0]
    x = jnp.transpose(x_nchw, (0, 2, 3, 1))
    xc = jnp.pad(x, ((0, 0), (0, 0), (0, 0), (0, cin_p - inplanes)))
    h1 = jnp.einsum("nhwc,cd->nhwd", xc.astype(jnp.bfloat16), pp["w1"],
                    preferred_element_type=jnp.float32)
    h1 = jnp.clip(h1 + pp["b1"][0], 0.0, 6.0)
    w2 = pp["w2"][:, :, None, :]
    h2 = lax.conv_general_dilated(
        h1, w2, window_strides=(stride, stride), padding=((1, 1), (1, 1)),
        dimension_numbers=("NHWC", "HWIO", "NHWC"),
        feature_group_count=h1.shape[-1])
    h2 = jnp.clip(h2 + pp["b2"][0], 0.0, 6.0)
    out = jnp.einsum("nhwc,cd->nhwd", h2.astype(jnp.bfloat16), pp["w3"],
                     preferred_element_type=jnp.float32) + pp["b3"][0]
    if stride == 1 and inplanes == outplanes:
        out = out + xc
    out = out[..., :outplanes]
    return jnp.transpose(out, (0, 3, 1, 2))


# ---------------------------------- main --------------------------------------

if __name__ == "__main__":
    N, INPLANES, OUTPLANES, H, W, T, STRIDE = 2, 8, 8, 16, 16, 4, 1

    key = jax.random.PRNGKey(0)
    kx, kp = jax.random.split(key)
    x = jax.random.normal(kx, (N, INPLANES, H, W), jnp.float32)    # NCHW input
    raw = make_params(kp, INPLANES, OUTPLANES, T)
    prepared = prepare_params(raw, inplanes=INPLANES, outplanes=OUTPLANES)

    fwd = jax.jit(functools.partial(
        linear_bottleneck_forward, stride=STRIDE, inplanes=INPLANES,
        outplanes=OUTPLANES))
    out = jax.block_until_ready(fwd(x, prepared))

    # Strong check: same folded bf16 weights, pure-JAX math.
    ref_bf16 = jax.block_until_ready(_reference_prepared(
        x, prepared, stride=STRIDE, inplanes=INPLANES, outplanes=OUTPLANES))
    # Sanity check: original f32 module semantics (loose tol covers bf16 MXU).
    ref_f32 = jax.block_until_ready(_reference(
        x, raw, stride=STRIDE, inplanes=INPLANES, outplanes=OUTPLANES))

    assert out.shape == ref_f32.shape, (out.shape, ref_f32.shape)
    err_bf16 = float(jnp.max(jnp.abs(out - ref_bf16)))
    err_f32 = float(jnp.max(jnp.abs(out - ref_f32)))
    assert err_bf16 < 5e-3, f"max abs error vs bf16-matched reference {err_bf16}"
    assert err_f32 < 2.5e-1, f"max abs error vs f32 reference {err_f32}"
    print("KERNEL_OK")
</pallas_src>

<mosaic_0001>
module attributes {stable_mosaic.version = 11 : i64} {
  func.func @_bottleneck_kernel(%arg0: i32, %arg1: i32, %arg2: memref<1x18x24x128xf32, #tpu.memory_space<vmem>>, %arg3: memref<128x128xbf16, #tpu.memory_space<vmem>>, %arg4: memref<1x128xf32, #tpu.memory_space<vmem>>, %arg5: memref<3x3x128xf32, #tpu.memory_space<vmem>>, %arg6: memref<1x128xf32, #tpu.memory_space<vmem>>, %arg7: memref<128x128xbf16, #tpu.memory_space<vmem>>, %arg8: memref<1x128xf32, #tpu.memory_space<vmem>>, %arg9: memref<1x256x128xf32, #tpu.memory_space<vmem>>, %arg10: memref<18x24x128xf32, #tpu.memory_space<vmem>>) attributes {dimension_semantics = [#tpu.dimension_semantics<parallel>, #tpu.dimension_semantics<parallel>], iteration_bounds = array<i64: 2, 1>, scalar_prefetch = 0 : i64, scratch_operands = 1 : i64, tpu.core_type = #tpu.core_type<tc>, window_params = [{transform_indices = @transform_0, window_bounds = array<i64: 1, 18, 24, 128>}, {pipeline_mode = #tpu.pipeline_mode<synchronous>, transform_indices = @transform_1, window_bounds = array<i64: 128, 128>}, {pipeline_mode = #tpu.pipeline_mode<synchronous>, transform_indices = @transform_2, window_bounds = array<i64: 1, 128>}, {pipeline_mode = #tpu.pipeline_mode<synchronous>, transform_indices = @transform_3, window_bounds = array<i64: 3, 3, 128>}, {pipeline_mode = #tpu.pipeline_mode<synchronous>, transform_indices = @transform_4, window_bounds = array<i64: 1, 128>}, {pipeline_mode = #tpu.pipeline_mode<synchronous>, transform_indices = @transform_5, window_bounds = array<i64: 128, 128>}, {pipeline_mode = #tpu.pipeline_mode<synchronous>, transform_indices = @transform_6, window_bounds = array<i64: 1, 128>}, {transform_indices = @transform_7, window_bounds = array<i64: 1, 256, 128>}]} {
    %c16_i32 = arith.constant 16 : i32
    %0 = arith.muli %arg1, %c16_i32 : i32
    %1 = tpu.assume_multiple %0, 8 : i32
    %c0 = arith.constant 0 : index
    %2 = arith.index_cast %1 : i32 to index
    %c0_0 = arith.constant 0 : index
    %c0_1 = arith.constant 0 : index
    %3 = vector.load %arg2[%c0, %2, %c0_0, %c0_1] : memref<1x18x24x128xf32, #tpu.memory_space<vmem>>, vector<1x18x24x128xf32>
    %4 = vector.shape_cast %3 : vector<1x18x24x128xf32> to vector<18x24x128xf32>
    %5 = vector.shape_cast %4 : vector<18x24x128xf32> to vector<432x128xf32>
    %6 = arith.truncf %5 : vector<432x128xf32> to vector<432x128xbf16>
    %c0_2 = arith.constant 0 : index
    %c0_3 = arith.constant 0 : index
    %7 = vector.load %arg3[%c0_2, %c0_3] : memref<128x128xbf16, #tpu.memory_space<vmem>>, vector<128x128xbf16>
    %cst = arith.constant dense<0.000000e+00> : vector<432x128xf32>
    %8 = tpu.matmul %6, %7, %cst {dimension_numbers = #tpu.dot_dimension_numbers<[1], [0], [0], [1], [0, 0, 1, 1], [], []>} : vector<432x128xbf16>, vector<128x128xbf16>, vector<432x128xf32> -> vector<432x128xf32>
    %c0_4 = arith.constant 0 : index
    %c0_5 = arith.constant 0 : index
    %9 = vector.load %arg4[%c0_4, %c0_5] : memref<1x128xf32, #tpu.memory_space<vmem>>, vector<1x128xf32>
    %10 = vector.broadcast %9 : vector<1x128xf32> to vector<432x128xf32>
    %11 = arith.addf %8, %10 : vector<432x128xf32>
    %cst_6 = arith.constant 0.000000e+00 : f32
    %cst_7 = arith.constant 6.000000e+00 : f32
    %12 = vector.broadcast %cst_6 : f32 to vector<432x128xf32>
    %13 = arith.maximumf %12, %11 : vector<432x128xf32>
    %14 = vector.broadcast %cst_7 : f32 to vector<432x128xf32>
    %15 = arith.minimumf %14, %13 : vector<432x128xf32>
    %16 = vector.shape_cast %15 : vector<432x128xf32> to vector<18x24x128xf32>
    %c0_8 = arith.constant 0 : index
    %c0_9 = arith.constant 0 : index
    %c0_10 = arith.constant 0 : index
    %17 = vector.load %arg10[%c0_8, %c0_9, %c0_10] : memref<18x24x128xf32, #tpu.memory_space<vmem>>, vector<18x24x128xf32>
    tpu.vector_store %arg10[%c0_8, %c0_9, %c0_10], %16 {strides = array<i32>} : memref<18x24x128xf32, #tpu.memory_space<vmem>>, vector<18x24x128xf32>,
    %cst_11 = arith.constant 0.000000e+00 : f32
    %18 = vector.broadcast %cst_11 : f32 to vector<18x1x128xf32>
    %c0_12 = arith.constant 0 : index
    %c0_13 = arith.constant 0 : index
    %c0_14 = arith.constant 0 : index
    %19 = vector.load %arg10[%c0_12, %c0_13, %c0_14] : memref<18x24x128xf32, #tpu.memory_space<vmem>>, vector<18x1x128xf32>
    tpu.vector_store %arg10[%c0_12, %c0_13, %c0_14], %18 {strides = array<i32>} : memref<18x24x128xf32, #tpu.memory_space<vmem>>, vector<18x1x128xf32>,
    %c0_15 = arith.constant 0 : index
    %c17 = arith.constant 17 : index
    %c0_16 = arith.constant 0 : index
    %20 = vector.load %arg10[%c0_15, %c17, %c0_16] : memref<18x24x128xf32, #tpu.memory_space<vmem>>, vector<18x1x128xf32>
    tpu.vector_store %arg10[%c0_15, %c17, %c0_16], %18 {strides = array<i32>} : memref<18x24x128xf32, #tpu.memory_space<vmem>>, vector<18x1x128xf32>,
    %c0_i32 = arith.constant 0 : i32
    %21 = arith.cmpi eq, %arg1, %c0_i32 : i32
    %22 = arith.extui %21 : i1 to i32
    %c0_i32_17 = arith.constant 0 : i32
    %23 = arith.cmpi ne, %22, %c0_i32_17 : i32
    scf.if %23 {
      %cst_88 = arith.constant 0.000000e+00 : f32
      %114 = vector.broadcast %cst_88 : f32 to vector<1x24x128xf32>
      %c0_89 = arith.constant 0 : index
      %c0_90 = arith.constant 0 : index
      %c0_91 = arith.constant 0 : index
      %115 = vector.load %arg10[%c0_89, %c0_90, %c0_91] : memref<18x24x128xf32, #tpu.memory_space<vmem>>, vector<1x24x128xf32>
      tpu.vector_store %arg10[%c0_89, %c0_90, %c0_91], %114 {strides = array<i32>} : memref<18x24x128xf32, #tpu.memory_space<vmem>>, vector<1x24x128xf32>,
    } else {
    }
    %c0_i32_18 = arith.constant 0 : i32
    %24 = arith.cmpi eq, %arg1, %c0_i32_18 : i32
    %25 = arith.extui %24 : i1 to i32
    %c0_i32_19 = arith.constant 0 : i32
    %26 = arith.cmpi ne, %25, %c0_i32_19 : i32
    scf.if %26 {
      %cst_88 = arith.constant 0.000000e+00 : f32
      %114 = vector.broadcast %cst_88 : f32 to vector<1x24x128xf32>
      %c17_89 = arith.constant 17 : index
      %c0_90 = arith.constant 0 : index
      %c0_91 = arith.constant 0 : index
      %115 = vector.load %arg10[%c17_89, %c0_90, %c0_91] : memref<18x24x128xf32, #tpu.memory_space<vmem>>, vector<1x24x128xf32>
      tpu.vector_store %arg10[%c17_89, %c0_90, %c0_91], %114 {strides = array<i32>} : memref<18x24x128xf32, #tpu.memory_space<vmem>>, vector<1x24x128xf32>,
    } else {
    }
    %cst_20 = arith.constant 0.000000e+00 : f32
    %27 = vector.broadcast %cst_20 : f32 to vector<16x16x128xf32>
    %c0_21 = arith.constant 0 : index
    %c0_22 = arith.constant 0 : index
    %c0_23 = arith.constant 0 : index
    %28 = vector.load %arg10[%c0_21, %c0_22, %c0_23] : memref<18x24x128xf32, #tpu.memory_space<vmem>>, vector<16x16x128xf32>
    %c0_24 = arith.constant 0 : index
    %c0_25 = arith.constant 0 : index
    %c0_26 = arith.constant 0 : index
    %29 = vector.load %arg5[%c0_24, %c0_25, %c0_26] : memref<3x3x128xf32, #tpu.memory_space<vmem>>, vector<1x1x128xf32>
    %30 = vector.shape_cast %29 : vector<1x1x128xf32> to vector<1x128xf32>
    %31 = vector.shape_cast %30 : vector<1x128xf32> to vector<1x1x128xf32>
    %32 = vector.broadcast %31 : vector<1x1x128xf32> to vector<16x16x128xf32>
    %33 = arith.mulf %28, %32 : vector<16x16x128xf32>
    %34 = arith.addf %27, %33 : vector<16x16x128xf32>
    %c0_27 = arith.constant 0 : index
    %c1 = arith.constant 1 : index
    %c0_28 = arith.constant 0 : index
    %35 = vector.load %arg10[%c0_27, %c1, %c0_28] : memref<18x24x128xf32, #tpu.memory_space<vmem>>, vector<16x16x128xf32>
    %c0_29 = arith.constant 0 : index
    %c1_30 = arith.constant 1 : index
    %c0_31 = arith.constant 0 : index
    %36 = vector.load %arg5[%c0_29, %c1_30, %c0_31] : memref<3x3x128xf32, #tpu.memory_space<vmem>>, vector<1x1x128xf32>
    %37 = vector.shape_cast %36 : vector<1x1x128xf32> to vector<1x128xf32>
    %38 = vector.shape_cast %37 : vector<1x128xf32> to vector<1x1x128xf32>
    %39 = vector.broadcast %38 : vector<1x1x128xf32> to vector<16x16x128xf32>
    %40 = arith.mulf %35, %39 : vector<16x16x128xf32>
    %41 = arith.addf %34, %40 : vector<16x16x128xf32>
    %c0_32 = arith.constant 0 : index
    %c2 = arith.constant 2 : index
    %c0_33 = arith.constant 0 : index
    %42 = vector.load %arg10[%c0_32, %c2, %c0_33] : memref<18x24x128xf32, #tpu.memory_space<vmem>>, vector<16x16x128xf32>
    %c0_34 = arith.constant 0 : index
    %c2_35 = arith.constant 2 : index
    %c0_36 = arith.constant 0 : index
    %43 = vector.load %arg5[%c0_34, %c2_35, %c0_36] : memref<3x3x128xf32, #tpu.memory_space<vmem>>, vector<1x1x128xf32>
    %44 = vector.shape_cast %43 : vector<1x1x128xf32> to vector<1x128xf32>
    %45 = vector.shape_cast %44 : vector<1x128xf32> to vector<1x1x128xf32>
    %46 = vector.broadcast %45 : vector<1x1x128xf32> to vector<16x16x128xf32>
    %47 = arith.mulf %42, %46 : vector<16x16x128xf32>
    %48 = arith.addf %41, %47 : vector<16x16x128xf32>
    %c1_37 = arith.constant 1 : index
    %c0_38 = arith.constant 0 : index
    %c0_39 = arith.constant 0 : index
    %49 = vector.load %arg10[%c1_37, %c0_38, %c0_39] : memref<18x24x128xf32, #tpu.memory_space<vmem>>, vector<16x16x128xf32>
    %c1_40 = arith.constant 1 : index
    %c0_41 = arith.constant 0 : index
    %c0_42 = arith.constant 0 : index
    %50 = vector.load %arg5[%c1_40, %c0_41, %c0_42] : memref<3x3x128xf32, #tpu.memory_space<vmem>>, vector<1x1x128xf32>
    %51 = vector.shape_cast %50 : vector<1x1x128xf32> to vector<1x128xf32>
    %52 = vector.shape_cast %51 : vector<1x128xf32> to vector<1x1x128xf32>
    %53 = vector.broadcast %52 : vector<1x1x128xf32> to vector<16x16x128xf32>
    %54 = arith.mulf %49, %53 : vector<16x16x128xf32>
    %55 = arith.addf %48, %54 : vector<16x16x128xf32>
    %c1_43 = arith.constant 1 : index
    %c1_44 = arith.constant 1 : index
    %c0_45 = arith.constant 0 : index
    %56 = vector.load %arg10[%c1_43, %c1_44, %c0_45] : memref<18x24x128xf32, #tpu.memory_space<vmem>>, vector<16x16x128xf32>
    %c1_46 = arith.constant 1 : index
    %c1_47 = arith.constant 1 : index
    %c0_48 = arith.constant 0 : index
    %57 = vector.load %arg5[%c1_46, %c1_47, %c0_48] : memref<3x3x128xf32, #tpu.memory_space<vmem>>, vector<1x1x128xf32>
    %58 = vector.shape_cast %57 : vector<1x1x128xf32> to vector<1x128xf32>
    %59 = vector.shape_cast %58 : vector<1x128xf32> to vector<1x1x128xf32>
    %60 = vector.broadcast %59 : vector<1x1x128xf32> to vector<16x16x128xf32>
    %61 = arith.mulf %56, %60 : vector<16x16x128xf32>
    %62 = arith.addf %55, %61 : vector<16x16x128xf32>
    %c1_49 = arith.constant 1 : index
    %c2_50 = arith.constant 2 : index
    %c0_51 = arith.constant 0 : index
    %63 = vector.load %arg10[%c1_49, %c2_50, %c0_51] : memref<18x24x128xf32, #tpu.memory_space<vmem>>, vector<16x16x128xf32>
    %c1_52 = arith.constant 1 : index
    %c2_53 = arith.constant 2 : index
    %c0_54 = arith.constant 0 : index
    %64 = vector.load %arg5[%c1_52, %c2_53, %c0_54] : memref<3x3x128xf32, #tpu.memory_space<vmem>>, vector<1x1x128xf32>
    %65 = vector.shape_cast %64 : vector<1x1x128xf32> to vector<1x128xf32>
    %66 = vector.shape_cast %65 : vector<1x128xf32> to vector<1x1x128xf32>
    %67 = vector.broadcast %66 : vector<1x1x128xf32> to vector<16x16x128xf32>
    %68 = arith.mulf %63, %67 : vector<16x16x128xf32>
    %69 = arith.addf %62, %68 : vector<16x16x128xf32>
    %c2_55 = arith.constant 2 : index
    %c0_56 = arith.constant 0 : index
    %c0_57 = arith.constant 0 : index
    %70 = vector.load %arg10[%c2_55, %c0_56, %c0_57] : memref<18x24x128xf32, #tpu.memory_space<vmem>>, vector<16x16x128xf32>
    %c2_58 = arith.constant 2 : index
    %c0_59 = arith.constant 0 : index
    %c0_60 = arith.constant 0 : index
    %71 = vector.load %arg5[%c2_58, %c0_59, %c0_60] : memref<3x3x128xf32, #tpu.memory_space<vmem>>, vector<1x1x128xf32>
    %72 = vector.shape_cast %71 : vector<1x1x128xf32> to vector<1x128xf32>
    %73 = vector.shape_cast %72 : vector<1x128xf32> to vector<1x1x128xf32>
    %74 = vector.broadcast %73 : vector<1x1x128xf32> to vector<16x16x128xf32>
    %75 = arith.mulf %70, %74 : vector<16x16x128xf32>
    %76 = arith.addf %69, %75 : vector<16x16x128xf32>
    %c2_61 = arith.constant 2 : index
    %c1_62 = arith.constant 1 : index
    %c0_63 = arith.constant 0 : index
    %77 = vector.load %arg10[%c2_61, %c1_62, %c0_63] : memref<18x24x128xf32, #tpu.memory_space<vmem>>, vector<16x16x128xf32>
    %c2_64 = arith.constant 2 : index
    %c1_65 = arith.constant 1 : index
    %c0_66 = arith.constant 0 : index
    %78 = vector.load %arg5[%c2_64, %c1_65, %c0_66] : memref<3x3x128xf32, #tpu.memory_space<vmem>>, vector<1x1x128xf32>
    %79 = vector.shape_cast %78 : vector<1x1x128xf32> to vector<1x128xf32>
    %80 = vector.shape_cast %79 : vector<1x128xf32> to vector<1x1x128xf32>
    %81 = vector.broadcast %80 : vector<1x1x128xf32> to vector<16x16x128xf32>
    %82 = arith.mulf %77, %81 : vector<16x16x128xf32>
    %83 = arith.addf %76, %82 : vector<16x16x128xf32>
    %c2_67 = arith.constant 2 : index
    %c2_68 = arith.constant 2 : index
    %c0_69 = arith.constant 0 : index
    %84 = vector.load %arg10[%c2_67, %c2_68, %c0_69] : memref<18x24x128xf32, #tpu.memory_space<vmem>>, vector<16x16x128xf32>
    %c2_70 = arith.constant 2 : index
    %c2_71 = arith.constant 2 : index
    %c0_72 = arith.constant 0 : index
    %85 = vector.load %arg5[%c2_70, %c2_71, %c0_72] : memref<3x3x128xf32, #tpu.memory_space<vmem>>, vector<1x1x128xf32>
    %86 = vector.shape_cast %85 : vector<1x1x128xf32> to vector<1x128xf32>
    %87 = vector.shape_cast %86 : vector<1x128xf32> to vector<1x1x128xf32>
    %88 = vector.broadcast %87 : vector<1x1x128xf32> to vector<16x16x128xf32>
    %89 = arith.mulf %84, %88 : vector<16x16x128xf32>
    %90 = arith.addf %83, %89 : vector<16x16x128xf32>
    %c0_73 = arith.constant 0 : index
    %c0_74 = arith.constant 0 : index
    %91 = vector.load %arg6[%c0_73, %c0_74] : memref<1x128xf32, #tpu.memory_space<vmem>>, vector<1x128xf32>
    %92 = vector.shape_cast %91 : vector<1x128xf32> to vector<1x1x128xf32>
    %93 = vector.broadcast %92 : vector<1x1x128xf32> to vector<16x16x128xf32>
    %94 = arith.addf %90, %93 : vector<16x16x128xf32>
    %cst_75 = arith.constant 0.000000e+00 : f32
    %cst_76 = arith.constant 6.000000e+00 : f32
    %95 = vector.broadcast %cst_75 : f32 to vector<16x16x128xf32>
    %96 = arith.maximumf %95, %94 : vector<16x16x128xf32>
    %97 = vector.broadcast %cst_76 : f32 to vector<16x16x128xf32>
    %98 = arith.minimumf %97, %96 : vector<16x16x128xf32>
    %99 = vector.shape_cast %98 : vector<16x16x128xf32> to vector<256x128xf32>
    %100 = arith.truncf %99 : vector<256x128xf32> to vector<256x128xbf16>
    %c0_77 = arith.constant 0 : index
    %c0_78 = arith.constant 0 : index
    %101 = vector.load %arg7[%c0_77, %c0_78] : memref<128x128xbf16, #tpu.memory_space<vmem>>, vector<128x128xbf16>
    %cst_79 = arith.constant dense<0.000000e+00> : vector<256x128xf32>
    %102 = tpu.matmul %100, %101, %cst_79 {dimension_numbers = #tpu.dot_dimension_numbers<[1], [0], [0], [1], [0, 0, 1, 1], [], []>} : vector<256x128xbf16>, vector<128x128xbf16>, vector<256x128xf32> -> vector<256x128xf32>
    %c0_80 = arith.constant 0 : index
    %c0_81 = arith.constant 0 : index
    %103 = vector.load %arg8[%c0_80, %c0_81] : memref<1x128xf32, #tpu.memory_space<vmem>>, vector<1x128xf32>
    %104 = vector.broadcast %103 : vector<1x128xf32> to vector<256x128xf32>
    %105 = arith.addf %102, %104 : vector<256x128xf32>
    %c1_i32 = arith.constant 1 : i32
    %106 = arith.addi %1, %c1_i32 : i32
    %c0_82 = arith.constant 0 : index
    %107 = arith.index_cast %106 : i32 to index
    %c1_83 = arith.constant 1 : index
    %c0_84 = arith.constant 0 : index
    %108 = vector.load %arg2[%c0_82, %107, %c1_83, %c0_84] : memref<1x18x24x128xf32, #tpu.memory_space<vmem>>, vector<1x16x16x128xf32>
    %109 = vector.shape_cast %108 : vector<1x16x16x128xf32> to vector<16x16x128xf32>
    %110 = vector.shape_cast %109 : vector<16x16x128xf32> to vector<256x128xf32>
    %111 = arith.addf %105, %110 : vector<256x128xf32>
    %112 = vector.shape_cast %111 : vector<256x128xf32> to vector<1x256x128xf32>
    %c0_85 = arith.constant 0 : index
    %c0_86 = arith.constant 0 : index
    %c0_87 = arith.constant 0 : index
    %113 = vector.load %arg9[%c0_85, %c0_86, %c0_87] : memref<1x256x128xf32, #tpu.memory_space<vmem>>, vector<1x256x128xf32>
    tpu.vector_store %arg9[%c0_85, %c0_86, %c0_87], %112 {strides = array<i32>} : memref<1x256x128xf32, #tpu.memory_space<vmem>>, vector<1x256x128xf32>,
    return
  }
  func.func @transform_0(%arg0: i32, %arg1: i32) -> (i32, i32, i32, i32) {
    %c0_i32 = arith.constant 0 : i32
    %c0_i32_0 = arith.constant 0 : i32
    %c0_i32_1 = arith.constant 0 : i32
    %c0_i32_2 = arith.constant 0 : i32
    return %arg0, %c0_i32, %c0_i32_0, %c0_i32_1 : i32, i32, i32, i32
  }
  func.func @transform_1(%arg0: i32, %arg1: i32) -> (i32, i32) {
    %c0_i32 = arith.constant 0 : i32
    %c0_i32_0 = arith.constant 0 : i32
    %c0_i32_1 = arith.constant 0 : i32
    return %c0_i32, %c0_i32_0 : i32, i32
  }
  func.func @transform_2(%arg0: i32, %arg1: i32) -> (i32, i32) {
    %c0_i32 = arith.constant 0 : i32
    %c0_i32_0 = arith.constant 0 : i32
    %c0_i32_1 = arith.constant 0 : i32
    return %c0_i32, %c0_i32_0 : i32, i32
  }
  func.func @transform_3(%arg0: i32, %arg1: i32) -> (i32, i32, i32) {
    %c0_i32 = arith.constant 0 : i32
    %c0_i32_0 = arith.constant 0 : i32
    %c0_i32_1 = arith.constant 0 : i32
    %c0_i32_2 = arith.constant 0 : i32
    return %c0_i32, %c0_i32_0, %c0_i32_1 : i32, i32, i32
  }
  func.func @transform_4(%arg0: i32, %arg1: i32) -> (i32, i32) {
    %c0_i32 = arith.constant 0 : i32
    %c0_i32_0 = arith.constant 0 : i32
    %c0_i32_1 = arith.constant 0 : i32
    return %c0_i32, %c0_i32_0 : i32, i32
  }
  func.func @transform_5(%arg0: i32, %arg1: i32) -> (i32, i32) {
    %c0_i32 = arith.constant 0 : i32
    %c0_i32_0 = arith.constant 0 : i32
    %c0_i32_1 = arith.constant 0 : i32
    return %c0_i32, %c0_i32_0 : i32, i32
  }
  func.func @transform_6(%arg0: i32, %arg1: i32) -> (i32, i32) {
    %c0_i32 = arith.constant 0 : i32
    %c0_i32_0 = arith.constant 0 : i32
    %c0_i32_1 = arith.constant 0 : i32
    return %c0_i32, %c0_i32_0 : i32, i32
  }
  func.func @transform_7(%arg0: i32, %arg1: i32) -> (i32, i32, i32) {
    %c0_i32 = arith.constant 0 : i32
    %c0_i32_0 = arith.constant 0 : i32
    return %arg0, %arg1, %c0_i32 : i32, i32, i32
  }
}

</mosaic_0001>

<llo_original>
// kernel: linear_bottleneck_forward.1
$region0: #{linear_bottleneck_forward.1}
  #allocation0 [shape = 'u32[]', space=smem, size = 0x4, offset = 0x4, fixed_abs, tag = 'smem constant byte address 0x4 - core index']
  #allocation1 [shape = 'u32[72,128]{1,0:T(1,128)}', space=vmem, size = 0x9000, scoped, tag = 'internal scratch']
  #allocation2 [shape = 'f32[18,24,128]{2,1,0:T(8,128)}', space=vmem, size = 0x36000, scoped, tag = 'scratch operand']
  %s0 = inlined_call_operand.vmem [shape: f32[2,18,24,128], index: 0, kind: input, shape index: {}]
  %s1 = inlined_call_operand.vmem [shape: bf16[128,128], index: 1, kind: input, shape index: {}]
  %s2 = inlined_call_operand.vmem [shape: f32[1,128], index: 2, kind: input, shape index: {}]
  %s3 = inlined_call_operand.vmem [shape: f32[3,3,128], index: 3, kind: input, shape index: {}]
  %s4 = inlined_call_operand.vmem [shape: f32[1,128], index: 4, kind: input, shape index: {}]
  %s5 = inlined_call_operand.vmem [shape: bf16[128,128], index: 5, kind: input, shape index: {}]
  %s6 = inlined_call_operand.vmem [shape: f32[1,128], index: 6, kind: input, shape index: {}]
  %s7 = inlined_call_operand.vmem [shape: f32[2,256,128], index: 7, kind: output, shape index: {}]
  %s8 = sld [smem:[#allocation0]]
  $region65: #{linear_bottleneck_forward.1} parent=0
    _
  %s10 = ssub.s32 1, %s8
  %s11 = scalar_select 0, %s10, %s8
  loop: start=0, step=1, limit=4
  $region2: #{linear_bottleneck_forward.1} parent=0 // loop_pre_header
    _
  $region3: #{linear_bottleneck_forward.1} parent=0 // loop_header
    %s13 = sphi 0, %s17
    %p14 = scmp.ge.s32.totalorder %s13, 4
    %s20 = sphi 0, %s32
    %s21 = sphi 0, %s28
    %s22 = sphi 0, %s20
    %s23 = sphi 0, %s21
    %s24 = sphi 0, %s22
    %s25 = sphi 0, %s23
    %s35 = sphi 0, %s37
    %s38 = sphi 0, %s35
    %s39 = sphi 0, %s38
    %s55 = sphi 0, %s39
    %s59 = sphi 0, %s59
    %s61 = sphi 0, %s59
    %s62 = sphi 0, %s61
    %s76 = sphi 0, %s62
    %s80 = sphi 0, %s80
    %s82 = sphi 0, %s80
    %s83 = sphi 0, %s82
    %s97 = sphi 0, %s83
    %s101 = sphi 0, %s101
    %s103 = sphi 0, %s101
    %s104 = sphi 0, %s103
    %s118 = sphi 0, %s104
    %s122 = sphi 0, %s122
    %s124 = sphi 0, %s122
    %s125 = sphi 0, %s124
    %s139 = sphi 0, %s125
    %s143 = sphi 0, %s143
    %s145 = sphi 0, %s143
    %s146 = sphi 0, %s145
    %s160 = sphi 0, %s146
    %s164 = sphi 0, %s164
    %s166 = sphi 0, %s164
    %s167 = sphi 0, %s166
    %s181 = sphi 0, %s167
    %s189 = sphi 0, %s191
    %s192 = sphi 0, %s189
    %s193 = sphi 0, %s192
    %s209 = sphi 0, %s193
  $region4: #{linear_bottleneck_forward.1} parent=0 // loop_header_branch
    %16 = sbr.rel (%p14) target = $region8
  $region5: #{linear_bottleneck_forward.1} parent=0 // loop_body
    %s18 = ssub.s32 %s13, 1
    %s19 = ssub.s32 %s13, 2
    %s26 = sadd.s32 1, %s21
    %p27 = scmp.ge.s32.totalorder %s26, 1
    %s28 = scalar_select %p27, 0, %s26
    %s29 = sadd.s32 1, %s20
    %s30 = scalar_select %p27, %s29, %s20
    %p31 = scmp.ge.s32.totalorder %s30, 2
    %s32 = scalar_select %p31, 0, %s30
    %s33 = ssub.s32 %s20, %s32
    %p34 = scmp.eq.s32.totalorder %s33, 0
    %s36 = sadd.s32 %s35, 1
    %s37 = scalar_select %p34, %s35, %s36
    %p40 = pneg %p34
    %p41 = scmp.eq.s32.totalorder %s13, 1
    %p42 = por %p40, %p41
    %p43 = scmp.ne.s32.totalorder %s35, %s38
    %p44 = scmp.eq.s32.totalorder %s13, 0
    %p45 = por %p43, %p44
    %p46 = scmp.ne.s32.totalorder %s35, %s38
    %p47 = scmp.eq.s32.totalorder %s18, 1
    %p48 = por %p46, %p47
    %p49 = scmp.ne.s32.totalorder %s38, %s39
    %p50 = scmp.eq.s32.totalorder %s18, 0
    %p51 = por %p49, %p50
    %p52 = scmp.ne.s32.totalorder %s38, %s39
    %p53 = scmp.eq.s32.totalorder %s19, 1
    %p54 = por %p52, %p53
    %p56 = scmp.ne.s32.totalorder %s39, %s55
    %p57 = scmp.eq.s32.totalorder %s19, 0
    %p58 = por %p56, %p57
    %s60 = sadd.s32 %s59, 1
    %p63 = scmp.eq.s32.totalorder %s13, 1
    %p64 = scmp.ne.s32.totalorder %s59, %s61
    %p65 = scmp.eq.s32.totalorder %s13, 0
    %p66 = por %p64, %p65
    %p67 = scmp.ne.s32.totalorder %s59, %s61
    %p68 = scmp.eq.s32.totalorder %s18, 1
    %p69 = por %p67, %p68
    %p70 = scmp.ne.s32.totalorder %s61, %s62
    %p71 = scmp.eq.s32.totalorder %s18, 0
    %p72 = por %p70, %p71
    %p73 = scmp.ne.s32.totalorder %s61, %s62
    %p74 = scmp.eq.s32.totalorder %s19, 1
    %p75 = por %p73, %p74
    %p77 = scmp.ne.s32.totalorder %s62, %s76
    %p78 = scmp.eq.s32.totalorder %s19, 0
    %p79 = por %p77, %p78
    %s81 = sadd.s32 %s80, 1
    %p84 = scmp.eq.s32.totalorder %s13, 1
    %p85 = scmp.ne.s32.totalorder %s80, %s82
    %p86 = scmp.eq.s32.totalorder %s13, 0
    %p87 = por %p85, %p86
    %p88 = scmp.ne.s32.totalorder %s80, %s82
    %p89 = scmp.eq.s32.totalorder %s18, 1
    %p90 = por %p88, %p89
    %p91 = scmp.ne.s32.totalorder %s82, %s83
    %p92 = scmp.eq.s32.totalorder %s18, 0
    %p93 = por %p91, %p92
    %p94 = scmp.ne.s32.totalorder %s82, %s83
    %p95 = scmp.eq.s32.totalorder %s19, 1
    %p96 = por %p94, %p95
    %p98 = scmp.ne.s32.totalorder %s83, %s97
    %p99 = scmp.eq.s32.totalorder %s19, 0
    %p100 = por %p98, %p99
    %s102 = sadd.s32 %s101, 1
    %p105 = scmp.eq.s32.totalorder %s13, 1
    %p106 = scmp.ne.s32.totalorder %s101, %s103
    %p107 = scmp.eq.s32.totalorder %s13, 0
    %p108 = por %p106, %p107
    %p109 = scmp.ne.s32.totalorder %s101, %s103
    %p110 = scmp.eq.s32.totalorder %s18, 1
    %p111 = por %p109, %p110
    %p112 = scmp.ne.s32.totalorder %s103, %s104
    %p113 = scmp.eq.s32.totalorder %s18, 0
    %p114 = por %p112, %p113
    %p115 = scmp.ne.s32.totalorder %s103, %s104
    %p116 = scmp.eq.s32.totalorder %s19, 1
    %p117 = por %p115, %p116
    %p119 = scmp.ne.s32.totalorder %s104, %s118
    %p120 = scmp.eq.s32.totalorder %s19, 0
    %p121 = por %p119, %p120
    %s123 = sadd.s32 %s122, 1
    %p126 = scmp.eq.s32.totalorder %s13, 1
    %p127 = scmp.ne.s32.totalorder %s122, %s124
    %p128 = scmp.eq.s32.totalorder %s13, 0
    %p129 = por %p127, %p128
    %p130 = scmp.ne.s32.totalorder %s122, %s124
    %p131 = scmp.eq.s32.totalorder %s18, 1
    %p132 = por %p130, %p131
    %p133 = scmp.ne.s32.totalorder %s124, %s125
    %p134 = scmp.eq.s32.totalorder %s18, 0
    %p135 = por %p133, %p134
    %p136 = scmp.ne.s32.totalorder %s124, %s125
    %p137 = scmp.eq.s32.totalorder %s19, 1
    %p138 = por %p136, %p137
    %p140 = scmp.ne.s32.totalorder %s125, %s139
    %p141 = scmp.eq.s32.totalorder %s19, 0
    %p142 = por %p140, %p141
    %s144 = sadd.s32 %s143, 1
    %p147 = scmp.eq.s32.totalorder %s13, 1
    %p148 = scmp.ne.s32.totalorder %s143, %s145
    %p149 = scmp.eq.s32.totalorder %s13, 0
    %p150 = por %p148, %p149
    %p151 = scmp.ne.s32.totalorder %s143, %s145
    %p152 = scmp.eq.s32.totalorder %s18, 1
    %p153 = por %p151, %p152
    %p154 = scmp.ne.s32.totalorder %s145, %s146
    %p155 = scmp.eq.s32.totalorder %s18, 0
    %p156 = por %p154, %p155
    %p157 = scmp.ne.s32.totalorder %s145, %s146
    %p158 = scmp.eq.s32.totalorder %s19, 1
    %p159 = por %p157, %p158
    %p161 = scmp.ne.s32.totalorder %s146, %s160
    %p162 = scmp.eq.s32.totalorder %s19, 0
    %p163 = por %p161, %p162
    %s165 = sadd.s32 %s164, 1
    %p168 = scmp.eq.s32.totalorder %s13, 1
    %p169 = scmp.ne.s32.totalorder %s164, %s166
    %p170 = scmp.eq.s32.totalorder %s13, 0
    %p171 = por %p169, %p170
    %p172 = scmp.ne.s32.totalorder %s164, %s166
    %p173 = scmp.eq.s32.totalorder %s18, 1
    %p174 = por %p172, %p173
    %p175 = scmp.ne.s32.totalorder %s166, %s167
    %p176 = scmp.eq.s32.totalorder %s18, 0
    %p177 = por %p175, %p176
    %p178 = scmp.ne.s32.totalorder %s166, %s167
    %p179 = scmp.eq.s32.totalorder %s19, 1
    %p180 = por %p178, %p179
    %p182 = scmp.ne.s32.totalorder %s167, %s181
    %p183 = scmp.eq.s32.totalorder %s19, 0
    %p184 = por %p182, %p183
    %s185 = ssub.s32 %s20, %s32
    %s186 = ssub.s32 %s21, %s28
    %s187 = sor.u32 %s185, %s186
    %p188 = scmp.eq.s32.totalorder %s187, 0
    %s190 = sadd.s32 %s189, 1
    %s191 = scalar_select %p188, %s189, %s190
    %p194 = pneg %p188
    %p195 = scmp.eq.s32.totalorder %s13, 1
    %p196 = por %p194, %p195
    %p197 = scmp.ne.s32.totalorder %s189, %s192
    %p198 = scmp.eq.s32.totalorder %s13, 0
    %p199 = por %p197, %p198
    %p200 = scmp.ne.s32.totalorder %s189, %s192
    %p201 = scmp.eq.s32.totalorder %s18, 1
    %p202 = por %p200, %p201
    %p203 = scmp.ne.s32.totalorder %s192, %s193
    %p204 = scmp.eq.s32.totalorder %s18, 0
    %p205 = por %p203, %p204
    %p206 = scmp.ne.s32.totalorder %s192, %s193
    %p207 = scmp.eq.s32.totalorder %s19, 1
    %p208 = por %p206, %p207
    %p210 = scmp.ne.s32.totalorder %s193, %s209
    %p211 = scmp.eq.s32.totalorder %s19, 0
    %p212 = por %p210, %p211
    %p213 = scmp.le.s32.totalorder 1, %s13
    %p214 = scmp.lt.s32.totalorder %s13, 3
    %p215 = pnand %p213, %p214
    %p216 = pneg %p215
    // Predicated region
    $region9: #{linear_bottleneck_forward.1} parent=5 // pred_check
      _
    $region10: #{linear_bottleneck_forward.1} parent=5 // pred_check_branch
      %218 = sbr.rel (%p215) target = $region12
    $region11: #{linear_bottleneck_forward.1} parent=5 // pred_region
      %s219 = ssub.s32 %s13, 1
      // Predicated region
      $region13: #{linear_bottleneck_forward.1} parent=11 // pred_check
        %p220 = pneg %p72
      $region14: #{linear_bottleneck_forward.1} parent=11 // pred_check_branch
        %222 = sbr.rel (%p220) target = $region16
      $region15: #{linear_bottleneck_forward.1} parent=11 // pred_region
        _
      $region16: #{linear_bottleneck_forward.1} parent=11 // pred_fallthru
        _
      // Predicated region
      $region17: #{linear_bottleneck_forward.1} parent=11 // pred_check
        %p223 = pneg %p93
      $region18: #{linear_bottleneck_forward.1} parent=11 // pred_check_branch
        %225 = sbr.rel (%p223) target = $region20
      $region19: #{linear_bottleneck_forward.1} parent=11 // pred_region
        _
      $region20: #{linear_bottleneck_forward.1} parent=11 // pred_fallthru
        _
      // Predicated region
      $region21: #{linear_bottleneck_forward.1} parent=11 // pred_check
        %p226 = pneg %p114
      $region22: #{linear_bottleneck_forward.1} parent=11 // pred_check_branch
        %228 = sbr.rel (%p226) target = $region24
      $region23: #{linear_bottleneck_forward.1} parent=11 // pred_region
        _
      $region24: #{linear_bottleneck_forward.1} parent=11 // pred_fallthru
        _
      // Predicated region
      $region25: #{linear_bottleneck_forward.1} parent=11 // pred_check
        %p229 = pneg %p135
      $region26: #{linear_bottleneck_forward.1} parent=11 // pred_check_branch
        %231 = sbr.rel (%p229) target = $region28
      $region27: #{linear_bottleneck_forward.1} parent=11 // pred_region
        _
      $region28: #{linear_bottleneck_forward.1} parent=11 // pred_fallthru
        _
      // Predicated region
      $region29: #{linear_bottleneck_forward.1} parent=11 // pred_check
        %p232 = pneg %p156
      $region30: #{linear_bottleneck_forward.1} parent=11 // pred_check_branch
        %234 = sbr.rel (%p232) target = $region32
      $region31: #{linear_bottleneck_forward.1} parent=11 // pred_region
        _
      $region32: #{linear_bottleneck_forward.1} parent=11 // pred_fallthru
        _
      // Predicated region
      $region33: #{linear_bottleneck_forward.1} parent=11 // pred_check
        %p235 = pneg %p177
      $region34: #{linear_bottleneck_forward.1} parent=11 // pred_check_branch
        %237 = sbr.rel (%p235) target = $region36
      $region35: #{linear_bottleneck_forward.1} parent=11 // pred_region
        _
      $region36: #{linear_bottleneck_forward.1} parent=11 // pred_fallthru
        _
    $region12: #{linear_bottleneck_forward.1} parent=5 // pred_fallthru
      _
    %p238 = scmp.lt.s32.totalorder %s13, 2
    // Predicated region
    $region37: #{linear_bottleneck_forward.1} parent=5 // pred_check
      %p239 = pneg %p238
    $region38: #{linear_bottleneck_forward.1} parent=5 // pred_check_branch
      %241 = sbr.rel (%p239) target = $region40
    $region39: #{linear_bottleneck_forward.1} parent=5 // pred_region
      // Predicated region
      $region41: #{linear_bottleneck_forward.1} parent=39 // pred_check
        %p242 = pneg %p45
      $region42: #{linear_bottleneck_forward.1} parent=39 // pred_check_branch
        %244 = sbr.rel (%p242) target = $region44
      $region43: #{linear_bottleneck_forward.1} parent=39 // pred_region
        %p245 = scmp.lt.s32.totalorder %s20, 1
        %s246 = scalar_select %p245, %s20, 1
        %s247 = smul.addr %s246, 54
        %s248 = smul.addr %s247, 8
        %s249 = scalar_lea.vmem %s0, %s248
      $region44: #{linear_bottleneck_forward.1} parent=39 // pred_fallthru
        _
    $region40: #{linear_bottleneck_forward.1} parent=5 // pred_fallthru
      _
    %p250 = scmp.le.s32.totalorder 1, %s13
    %p251 = scmp.lt.s32.totalorder %s13, 3
    %p252 = pnand %p250, %p251
    %p253 = pneg %p252
    // Predicated region
    $region45: #{linear_bottleneck_forward.1} parent=5 // pred_check
      _
    $region46: #{linear_bottleneck_forward.1} parent=5 // pred_check_branch
      %255 = sbr.rel (%p252) target = $region48
    $region47: #{linear_bottleneck_forward.1} parent=5 // pred_region
      %s256 = ssub.s32 %s13, 1
      %p257 = scmp.lt.s32.totalorder %s22, 1
      %s258 = scalar_select %p257, %s22, 1
      %s259 = smul.addr %s258, 54
      %s260 = smul.addr %s259, 8
      %s261 = scalar_lea.vmem %s0, %s260
      %p262 = pneg %p51
      %p263 = pneg %p48
      %p264 = pneg %p72
      %p265 = pneg %p69
      %p266 = pneg %p93
      %p267 = pneg %p90
      %p268 = pneg %p114
      %p269 = pneg %p111
      %p270 = pneg %p135
      %p271 = pneg %p132
      %p272 = pneg %p156
      %p273 = pneg %p153
      %p274 = pneg %p177
      %p275 = pneg %p174
      %p276 = pneg %p205
      %p277 = pneg %p202
      %s278 = smul.u32 32, %s23
      %p279 = scmp.lt.s32.totalorder %s22, 1
      %s280 = scalar_select %p279, %s22, 1
      %p281 = scmp.lt.s32.totalorder %s278, 31
      %s282 = scalar_select %p281, %s278, 31
      %s283 = smul.addr %s280, 32
      %s284 = sadd.s32 %s282, %s283
      %s285 = smul.addr %s284, 8
      %s286 = scalar_lea.vmem %s7, %s285
      %p287 = scmp.lt.s32.totalorder %s22, 1
      %s288 = scalar_select %p287, %s22, 1
      %s289 = smul.addr %s288, 54
      %s290 = smul.addr %s289, 8
      %s291 = scalar_lea.vmem %s0, %s290
      %s292 = smul.u32 32, %s23
      %p293 = scmp.lt.s32.totalorder %s22, 1
      %s294 = scalar_select %p293, %s22, 1
      %p295 = scmp.lt.s32.totalorder %s292, 31
      %s296 = scalar_select %p295, %s292, 31
      %s297 = smul.addr %s294, 32
      %s298 = sadd.s32 %s296, %s297
      %s299 = smul.addr %s298, 8
      %s300 = scalar_lea.vmem %s7, %s299
      %s301 = smul.u32 32, %s23
      %s302 = smul.u32 %s23, 16
      %s303 = smul.u32 %s302, 24
      %s304 = scalar_lea.vmem %s291, %s303
      %v305 = vld [vmem:[%s304] sm:$0xff]
      %v306 = vld [vmem:[%s304 + $0x8] sm:$0xff]
      %v307 = vld [vmem:[%s304 + $0x10] sm:$0xff]
      %v308 = vld [vmem:[%s304 + $0x18] sm:$0xff]
      %v309 = vld [vmem:[%s304 + $0x20] sm:$0xff]
      %v310 = vld [vmem:[%s304 + $0x28] sm:$0xff]
      %v311 = vld [vmem:[%s304 + $0x30] sm:$0xff]
      %v312 = vld [vmem:[%s304 + $0x38] sm:$0xff]
      %v313 = vld [vmem:[%s304 + $0x40] sm:$0xff]
      %v314 = vld [vmem:[%s304 + $0x48] sm:$0xff]
      %v315 = vld [vmem:[%s304 + $0x50] sm:$0xff]
      %v316 = vld [vmem:[%s304 + $0x58] sm:$0xff]
      %v317 = vld [vmem:[%s304 + $0x60] sm:$0xff]
      %v318 = vld [vmem:[%s304 + $0x68] sm:$0xff]
      %v319 = vld [vmem:[%s304 + $0x70] sm:$0xff]
      %v320 = vld [vmem:[%s304 + $0x78] sm:$0xff]
      %v321 = vld [vmem:[%s304 + $0x80] sm:$0xff]
      %v322 = vld [vmem:[%s304 + $0x88] sm:$0xff]
      %v323 = vld [vmem:[%s304 + $0x90] sm:$0xff]
      %v324 = vld [vmem:[%s304 + $0x98] sm:$0xff]
      %v325 = vld [vmem:[%s304 + $0xa0] sm:$0xff]
      %v326 = vld [vmem:[%s304 + $0xa8] sm:$0xff]
      %v327 = vld [vmem:[%s304 + $0xb0] sm:$0xff]
      %v328 = vld [vmem:[%s304 + $0xb8] sm:$0xff]
      %v329 = vld [vmem:[%s304 + $0xc0] sm:$0xff]
      %v330 = vld [vmem:[%s304 + $0xc8] sm:$0xff]
      %v331 = vld [vmem:[%s304 + $0xd0] sm:$0xff]
      %v332 = vld [vmem:[%s304 + $0xd8] sm:$0xff]
      %v333 = vld [vmem:[%s304 + $0xe0] sm:$0xff]
      %v334 = vld [vmem:[%s304 + $0xe8] sm:$0xff]
      %v335 = vld [vmem:[%s304 + $0xf0] sm:$0xff]
      %v336 = vld [vmem:[%s304 + $0xf8] sm:$0xff]
      %v337 = vld [vmem:[%s304 + $0x100] sm:$0xff]
      %v338 = vld [vmem:[%s304 + $0x108] sm:$0xff]
      %v339 = vld [vmem:[%s304 + $0x110] sm:$0xff]
      %v340 = vld [vmem:[%s304 + $0x118] sm:$0xff]
      %v341 = vld [vmem:[%s304 + $0x120] sm:$0xff]
      %v342 = vld [vmem:[%s304 + $0x128] sm:$0xff]
      %v343 = vld [vmem:[%s304 + $0x130] sm:$0xff]
      %v344 = vld [vmem:[%s304 + $0x138] sm:$0xff]
      %v345 = vld [vmem:[%s304 + $0x140] sm:$0xff]
      %v346 = vld [vmem:[%s304 + $0x148] sm:$0xff]
      %v347 = vld [vmem:[%s304 + $0x150] sm:$0xff]
      %v348 = vld [vmem:[%s304 + $0x158] sm:$0xff]
      %v349 = vld [vmem:[%s304 + $0x160] sm:$0xff]
      %v350 = vld [vmem:[%s304 + $0x168] sm:$0xff]
      %v351 = vld [vmem:[%s304 + $0x170] sm:$0xff]
      %v352 = vld [vmem:[%s304 + $0x178] sm:$0xff]
      %v353 = vld [vmem:[%s304 + $0x180] sm:$0xff]
      %v354 = vld [vmem:[%s304 + $0x188] sm:$0xff]
      %v355 = vld [vmem:[%s304 + $0x190] sm:$0xff]
      %v356 = vld [vmem:[%s304 + $0x198] sm:$0xff]
      %v357 = vld [vmem:[%s304 + $0x1a0] sm:$0xff]
      %v358 = vld [vmem:[%s304 + $0x1a8] sm:$0xff]
      %v359 = vpack.c.bf16 %v306, %v305
      %v360 = vpack.c.bf16 %v308, %v307
      %v361 = vpack.c.bf16 %v310, %v309
      %v362 = vpack.c.bf16 %v312, %v311
      %v363 = vpack.c.bf16 %v314, %v313
      %v364 = vpack.c.bf16 %v316, %v315
      %v365 = vpack.c.bf16 %v318, %v317
      %v366 = vpack.c.bf16 %v320, %v319
      %v367 = vpack.c.bf16 %v322, %v321
      %v368 = vpack.c.bf16 %v324, %v323
      %v369 = vpack.c.bf16 %v326, %v325
      %v370 = vpack.c.bf16 %v328, %v327
      %v371 = vpack.c.bf16 %v330, %v329
      %v372 = vpack.c.bf16 %v332, %v331
      %v373 = vpack.c.bf16 %v334, %v333
      %v374 = vpack.c.bf16 %v336, %v335
      %v375 = vpack.c.bf16 %v338, %v337
      %v376 = vpack.c.bf16 %v340, %v339
      %v377 = vpack.c.bf16 %v342, %v341
      %v378 = vpack.c.bf16 %v344, %v343
      %v379 = vpack.c.bf16 %v346, %v345
      %v380 = vpack.c.bf16 %v348, %v347
      %v381 = vpack.c.bf16 %v350, %v349
      %v382 = vpack.c.bf16 %v352, %v351
      %v383 = vpack.c.bf16 %v354, %v353
      %v384 = vpack.c.bf16 %v356, %v355
      %v385 = vpack.c.bf16 %v358, %v357
      %v386 = vld [vmem:[%s1] sm:$0xf]
      %v387 = vld [vmem:[%s1 + $0x4] sm:$0xf]
      %v388 = vld [vmem:[%s1 + $0x8] sm:$0xf]
      %v389 = vld [vmem:[%s1 + $0xc] sm:$0xf]
      %v390 = vld [vmem:[%s1 + $0x10] sm:$0xf]
      %v391 = vld [vmem:[%s1 + $0x14] sm:$0xf]
      %v392 = vld [vmem:[%s1 + $0x18] sm:$0xf]
      %v393 = vld [vmem:[%s1 + $0x1c] sm:$0xf]
      %v394 = vld [vmem:[%s1 + $0x20] sm:$0xf]
      %v395 = vld [vmem:[%s1 + $0x24] sm:$0xf]
      %v396 = vld [vmem:[%s1 + $0x28] sm:$0xf]
      %v397 = vld [vmem:[%s1 + $0x2c] sm:$0xf]
      %v398 = vld [vmem:[%s1 + $0x30] sm:$0xf]
      %v399 = vld [vmem:[%s1 + $0x34] sm:$0xf]
      %v400 = vld [vmem:[%s1 + $0x38] sm:$0xf]
      %v401 = vld [vmem:[%s1 + $0x3c] sm:$0xf]
      %v402 = vld [vmem:[%s2] sm:$0x1]
      %v404 = vperm.slane %v402, 0
      %v422 = vunpack.c.l.b16 %v386
      %v423 = vunpack.c.l.b16 %v387
      %v424 = vunpack.c.l.b16 %v388
      %v425 = vunpack.c.l.b16 %v389
      %v426 = vunpack.c.l.b16 %v390
      %v427 = vunpack.c.l.b16 %v391
      %v428 = vunpack.c.l.b16 %v392
      %v429 = vunpack.c.l.b16 %v393
      %v430 = vunpack.c.l.b16 %v394
      %v431 = vunpack.c.l.b16 %v395
      %v432 = vunpack.c.l.b16 %v396
      %v433 = vunpack.c.l.b16 %v397
      %v434 = vunpack.c.l.b16 %v398
      %v435 = vunpack.c.l.b16 %v399
      %v436 = vunpack.c.l.b16 %v400
      %v437 = vunpack.c.l.b16 %v401
      %v438 = vpack.c.b16 %v423, %v422
      %v439 = vpack.c.b16 %v425, %v424
      %v440 = vpack.c.b16 %v427, %v426
      %v441 = vpack.c.b16 %v429, %v428
      %v442 = vpack.c.b16 %v431, %v430
      %v443 = vpack.c.b16 %v433, %v432
      %v444 = vpack.c.b16 %v435, %v434
      %v445 = vpack.c.b16 %v437, %v436
      %454 = vmatpush.bf16.msra.mxu0 %v445
      %455 = vmatpush.bf16.msra.mxu0 %v444
      %456 = vmatpush.bf16.msra.mxu0 %v443
      %457 = vmatpush.bf16.msra.mxu0 %v442
      %458 = vmatpush.bf16.msra.mxu0 %v441
      %459 = vmatpush.bf16.msra.mxu0 %v440
      %460 = vmatpush.bf16.msra.mxu0 %v439
      %461 = vmatpush.bf16.msra.mxu0 %v438
      %462 = vmatmul.bf16.gmra.mxu0 %v359
      %v463 = vpop.f32.mrf.mxu0
      %v464 = vadd.f32 %v404, %v463
      %v465 = vpop.f32.mrf.mxu0
      %v466 = vadd.f32 %v404, %v465
      %467 = vmatmul.bf16.gmra.mxu0 %v360
      %v468 = vpop.f32.mrf.mxu0
      %v469 = vadd.f32 %v404, %v468
      %v470 = vpop.f32.mrf.mxu0
      %v471 = vadd.f32 %v404, %v470
      %472 = vmatmul.bf16.gmra.mxu0 %v361
      %v473 = vpop.f32.mrf.mxu0
      %v474 = vadd.f32 %v404, %v473
      %v475 = vpop.f32.mrf.mxu0
      %v476 = vadd.f32 %v404, %v475
      %477 = vmatmul.bf16.gmra.mxu0 %v362
      %v478 = vpop.f32.mrf.mxu0
      %v479 = vadd.f32 %v404, %v478
      %v480 = vpop.f32.mrf.mxu0
      %v481 = vadd.f32 %v404, %v480
      %482 = vmatmul.bf16.gmra.mxu0 %v363
      %v483 = vpop.f32.mrf.mxu0
      %v484 = vadd.f32 %v404, %v483
      %v485 = vpop.f32.mrf.mxu0
      %v486 = vadd.f32 %v404, %v485
      %487 = vmatmul.bf16.gmra.mxu0 %v364
      %v488 = vpop.f32.mrf.mxu0
      %v489 = vadd.f32 %v404, %v488
      %v490 = vpop.f32.mrf.mxu0
      %v491 = vadd.f32 %v404, %v490
      %492 = vmatmul.bf16.gmra.mxu0 %v365
      %v493 = vpop.f32.mrf.mxu0
      %v494 = vadd.f32 %v404, %v493
      %v495 = vpop.f32.mrf.mxu0
      %v496 = vadd.f32 %v404, %v495
      %497 = vmatmul.bf16.gmra.mxu0 %v366
      %v498 = vpop.f32.mrf.mxu0
      %v499 = vadd.f32 %v404, %v498
      %v500 = vpop.f32.mrf.mxu0
      %v501 = vadd.f32 %v404, %v500
      %502 = vmatmul.bf16.gmra.mxu0 %v367
      %v503 = vpop.f32.mrf.mxu0
      %v504 = vadd.f32 %v404, %v503
      %v505 = vpop.f32.mrf.mxu0
      %v506 = vadd.f32 %v404, %v505
      %507 = vmatmul.bf16.gmra.mxu0 %v368
      %v508 = vpop.f32.mrf.mxu0
      %v509 = vadd.f32 %v404, %v508
      %v510 = vpop.f32.mrf.mxu0
      %v511 = vadd.f32 %v404, %v510
      %512 = vmatmul.bf16.gmra.mxu0 %v369
      %v513 = vpop.f32.mrf.mxu0
      %v514 = vadd.f32 %v404, %v513
      %v515 = vpop.f32.mrf.mxu0
      %v516 = vadd.f32 %v404, %v515
      %517 = vmatmul.bf16.gmra.mxu0 %v370
      %v518 = vpop.f32.mrf.mxu0
      %v519 = vadd.f32 %v404, %v518
      %v520 = vpop.f32.mrf.mxu0
      %v521 = vadd.f32 %v404, %v520
      %522 = vmatmul.bf16.gmra.mxu0 %v371
      %v523 = vpop.f32.mrf.mxu0
      %v524 = vadd.f32 %v404, %v523
      %v525 = vpop.f32.mrf.mxu0
      %v526 = vadd.f32 %v404, %v525
      %527 = vmatmul.bf16.gmra.mxu0 %v372
      %v528 = vpop.f32.mrf.mxu0
      %v529 = vadd.f32 %v404, %v528
      %v530 = vpop.f32.mrf.mxu0
      %v531 = vadd.f32 %v404, %v530
      %532 = vmatmul.bf16.gmra.mxu0 %v373
      %v533 = vpop.f32.mrf.mxu0
      %v534 = vadd.f32 %v404, %v533
      %v535 = vpop.f32.mrf.mxu0
      %v536 = vadd.f32 %v404, %v535
      %537 = vmatmul.bf16.gmra.mxu0 %v374
      %v538 = vpop.f32.mrf.mxu0
      %v539 = vadd.f32 %v404, %v538
      %v540 = vpop.f32.mrf.mxu0
      %v541 = vadd.f32 %v404, %v540
      %542 = vmatmul.bf16.gmra.mxu0 %v375
      %v543 = vpop.f32.mrf.mxu0
      %v544 = vadd.f32 %v404, %v543
      %v545 = vpop.f32.mrf.mxu0
      %v546 = vadd.f32 %v404, %v545
      %547 = vmatmul.bf16.gmra.mxu0 %v376
      %v548 = vpop.f32.mrf.mxu0
      %v549 = vadd.f32 %v404, %v548
      %v550 = vpop.f32.mrf.mxu0
      %v551 = vadd.f32 %v404, %v550
      %552 = vmatmul.bf16.gmra.mxu0 %v377
      %v553 = vpop.f32.mrf.mxu0
      %v554 = vadd.f32 %v404, %v553
      %v555 = vpop.f32.mrf.mxu0
      %v556 = vadd.f32 %v404, %v555
      %557 = vmatmul.bf16.gmra.mxu0 %v378
      %v558 = vpop.f32.mrf.mxu0
      %v559 = vadd.f32 %v404, %v558
      %v560 = vpop.f32.mrf.mxu0
      %v561 = vadd.f32 %v404, %v560
      %562 = vmatmul.bf16.gmra.mxu0 %v379
      %v563 = vpop.f32.mrf.mxu0
      %v564 = vadd.f32 %v404, %v563
      %v565 = vpop.f32.mrf.mxu0
      %v566 = vadd.f32 %v404, %v565
      %567 = vmatmul.bf16.gmra.mxu0 %v380
      %v568 = vpop.f32.mrf.mxu0
      %v569 = vadd.f32 %v404, %v568
      %v570 = vpop.f32.mrf.mxu0
      %v571 = vadd.f32 %v404, %v570
      %572 = vmatmul.bf16.gmra.mxu0 %v381
      %v573 = vpop.f32.mrf.mxu0
      %v574 = vadd.f32 %v404, %v573
      %v575 = vpop.f32.mrf.mxu0
      %v576 = vadd.f32 %v404, %v575
      %577 = vmatmul.bf16.gmra.mxu0 %v382
      %v578 = vpop.f32.mrf.mxu0
      %v579 = vadd.f32 %v404, %v578
      %v580 = vpop.f32.mrf.mxu0
      %v581 = vadd.f32 %v404, %v580
      %582 = vmatmul.bf16.gmra.mxu0 %v383
      %v583 = vpop.f32.mrf.mxu0
      %v584 = vadd.f32 %v404, %v583
      %v585 = vpop.f32.mrf.mxu0
      %v586 = vadd.f32 %v404, %v585
      %587 = vmatmul.bf16.gmra.mxu0 %v384
      %v588 = vpop.f32.mrf.mxu0
      %v589 = vadd.f32 %v404, %v588
      %v590 = vpop.f32.mrf.mxu0
      %v591 = vadd.f32 %v404, %v590
      %592 = vmatmul.bf16.gmra.mxu0 %v385
      %v593 = vpop.f32.mrf.mxu0
      %v594 = vadd.f32 %v404, %v593
      %v595 = vpop.f32.mrf.mxu0
      %v596 = vadd.f32 %v404, %v595
      %597 = vdwg.mxu0
      %v598 = vmax.f32 %v464, 0.0
      %v599 = vmax.f32 %v466, 0.0
      %v600 = vmax.f32 %v469, 0.0
      %v601 = vmax.f32 %v471, 0.0
      %v602 = vmax.f32 %v474, 0.0
      %v603 = vmax.f32 %v476, 0.0
      %v604 = vmax.f32 %v479, 0.0
      %v605 = vmax.f32 %v481, 0.0
      %v606 = vmax.f32 %v484, 0.0
      %v607 = vmax.f32 %v486, 0.0
      %v608 = vmax.f32 %v489, 0.0
      %v609 = vmax.f32 %v491, 0.0
      %v610 = vmax.f32 %v494, 0.0
      %v611 = vmax.f32 %v496, 0.0
      %v612 = vmax.f32 %v499, 0.0
      %v613 = vmax.f32 %v501, 0.0
      %v614 = vmax.f32 %v504, 0.0
      %v615 = vmax.f32 %v506, 0.0
      %v616 = vmax.f32 %v509, 0.0
      %v617 = vmax.f32 %v511, 0.0
      %v618 = vmax.f32 %v514, 0.0
      %v619 = vmax.f32 %v516, 0.0
      %v620 = vmax.f32 %v519, 0.0
      %v621 = vmax.f32 %v521, 0.0
      %v622 = vmax.f32 %v524, 0.0
      %v623 = vmax.f32 %v526, 0.0
      %v624 = vmax.f32 %v529, 0.0
      %v625 = vmax.f32 %v531, 0.0
      %v626 = vmax.f32 %v534, 0.0
      %v627 = vmax.f32 %v536, 0.0
      %v628 = vmax.f32 %v539, 0.0
      %v629 = vmax.f32 %v541, 0.0
      %v630 = vmax.f32 %v544, 0.0
      %v631 = vmax.f32 %v546, 0.0
      %v632 = vmax.f32 %v549, 0.0
      %v633 = vmax.f32 %v551, 0.0
      %v634 = vmax.f32 %v554, 0.0
      %v635 = vmax.f32 %v556, 0.0
      %v636 = vmax.f32 %v559, 0.0
      %v637 = vmax.f32 %v561, 0.0
      %v638 = vmax.f32 %v564, 0.0
      %v639 = vmax.f32 %v566, 0.0
      %v640 = vmax.f32 %v569, 0.0
      %v641 = vmax.f32 %v571, 0.0
      %v642 = vmax.f32 %v574, 0.0
      %v643 = vmax.f32 %v576, 0.0
      %v644 = vmax.f32 %v579, 0.0
      %v645 = vmax.f32 %v581, 0.0
      %v646 = vmax.f32 %v584, 0.0
      %v647 = vmax.f32 %v586, 0.0
      %v648 = vmax.f32 %v589, 0.0
      %v649 = vmax.f32 %v591, 0.0
      %v650 = vmax.f32 %v594, 0.0
      %v651 = vmax.f32 %v596, 0.0
      %v652 = vmin.f32 %v598, 6.0
      %v653 = vmin.f32 %v599, 6.0
      %v654 = vmin.f32 %v600, 6.0
      %v655 = vmin.f32 %v601, 6.0
      %v656 = vmin.f32 %v602, 6.0
      %v657 = vmin.f32 %v603, 6.0
      %v658 = vmin.f32 %v604, 6.0
      %v659 = vmin.f32 %v605, 6.0
      %v660 = vmin.f32 %v606, 6.0
      %v661 = vmin.f32 %v607, 6.0
      %v662 = vmin.f32 %v608, 6.0
      %v663 = vmin.f32 %v609, 6.0
      %v664 = vmin.f32 %v610, 6.0
      %v665 = vmin.f32 %v611, 6.0
      %v666 = vmin.f32 %v612, 6.0
      %v667 = vmin.f32 %v613, 6.0
      %v668 = vmin.f32 %v614, 6.0
      %v669 = vmin.f32 %v615, 6.0
      %v670 = vmin.f32 %v616, 6.0
      %v671 = vmin.f32 %v617, 6.0
      %v672 = vmin.f32 %v618, 6.0
      %v673 = vmin.f32 %v619, 6.0
      %v674 = vmin.f32 %v620, 6.0
      %v675 = vmin.f32 %v621, 6.0
      %v676 = vmin.f32 %v622, 6.0
      %v677 = vmin.f32 %v623, 6.0
      %v678 = vmin.f32 %v624, 6.0
      %v679 = vmin.f32 %v625, 6.0
      %v680 = vmin.f32 %v626, 6.0
      %v681 = vmin.f32 %v627, 6.0
      %v682 = vmin.f32 %v628, 6.0
      %v683 = vmin.f32 %v629, 6.0
      %v684 = vmin.f32 %v630, 6.0
      %v685 = vmin.f32 %v631, 6.0
      %v686 = vmin.f32 %v632, 6.0
      %v687 = vmin.f32 %v633, 6.0
      %v688 = vmin.f32 %v634, 6.0
      %v689 = vmin.f32 %v635, 6.0
      %v690 = vmin.f32 %v636, 6.0
      %v691 = vmin.f32 %v637, 6.0
      %v692 = vmin.f32 %v638, 6.0
      %v693 = vmin.f32 %v639, 6.0
      %v694 = vmin.f32 %v640, 6.0
      %v695 = vmin.f32 %v641, 6.0
      %v696 = vmin.f32 %v642, 6.0
      %v697 = vmin.f32 %v643, 6.0
      %v698 = vmin.f32 %v644, 6.0
      %v699 = vmin.f32 %v645, 6.0
      %v700 = vmin.f32 %v646, 6.0
      %v701 = vmin.f32 %v647, 6.0
      %v702 = vmin.f32 %v648, 6.0
      %v703 = vmin.f32 %v649, 6.0
      %v704 = vmin.f32 %v650, 6.0
      %v705 = vmin.f32 %v651, 6.0
      %706 = vst [vmem:[#allocation2] sm:$0xff] %v652
      %707 = vst [vmem:[#allocation2 + $0x8] sm:$0xff] %v653
      %708 = vst [vmem:[#allocation2 + $0x10] sm:$0xff] %v654
      %709 = vst [vmem:[#allocation2 + $0x18] sm:$0xff] %v655
      %710 = vst [vmem:[#allocation2 + $0x20] sm:$0xff] %v656
      %711 = vst [vmem:[#allocation2 + $0x28] sm:$0xff] %v657
      %712 = vst [vmem:[#allocation2 + $0x30] sm:$0xff] %v658
      %713 = vst [vmem:[#allocation2 + $0x38] sm:$0xff] %v659
      %714 = vst [vmem:[#allocation2 + $0x40] sm:$0xff] %v660
      %715 = vst [vmem:[#allocation2 + $0x48] sm:$0xff] %v661
      %716 = vst [vmem:[#allocation2 + $0x50] sm:$0xff] %v662
      %717 = vst [vmem:[#allocation2 + $0x58] sm:$0xff] %v663
      %718 = vst [vmem:[#allocation2 + $0x60] sm:$0xff] %v664
      %719 = vst [vmem:[#allocation2 + $0x68] sm:$0xff] %v665
      %720 = vst [vmem:[#allocation2 + $0x70] sm:$0xff] %v666
      %721 = vst [vmem:[#allocation2 + $0x78] sm:$0xff] %v667
      %722 = vst [vmem:[#allocation2 + $0x80] sm:$0xff] %v668
      %723 = vst [vmem:[#allocation2 + $0x88] sm:$0xff] %v669
      %724 = vst [vmem:[#allocation2 + $0x90] sm:$0xff] %v670
      %725 = vst [vmem:[#allocation2 + $0x98] sm:$0xff] %v671
      %726 = vst [vmem:[#allocation2 + $0xa0] sm:$0xff] %v672
      %727 = vst [vmem:[#allocation2 + $0xa8] sm:$0xff] %v673
      %728 = vst [vmem:[#allocation2 + $0xb0] sm:$0xff] %v674
      %729 = vst [vmem:[#allocation2 + $0xb8] sm:$0xff] %v675
      %730 = vst [vmem:[#allocation2 + $0xc0] sm:$0xff] %v676
      %731 = vst [vmem:[#allocation2 + $0xc8] sm:$0xff] %v677
      %732 = vst [vmem:[#allocation2 + $0xd0] sm:$0xff] %v678
      %733 = vst [vmem:[#allocation2 + $0xd8] sm:$0xff] %v679
      %734 = vst [vmem:[#allocation2 + $0xe0] sm:$0xff] %v680
      %735 = vst [vmem:[#allocation2 + $0xe8] sm:$0xff] %v681
      %736 = vst [vmem:[#allocation2 + $0xf0] sm:$0xff] %v682
      %737 = vst [vmem:[#allocation2 + $0xf8] sm:$0xff] %v683
      %738 = vst [vmem:[#allocation2 + $0x100] sm:$0xff] %v684
      %739 = vst [vmem:[#allocation2 + $0x108] sm:$0xff] %v685
      %740 = vst [vmem:[#allocation2 + $0x110] sm:$0xff] %v686
      %741 = vst [vmem:[#allocation2 + $0x118] sm:$0xff] %v687
      %742 = vst [vmem:[#allocation2 + $0x120] sm:$0xff] %v688
      %743 = vst [vmem:[#allocation2 + $0x128] sm:$0xff] %v689
      %744 = vst [vmem:[#allocation2 + $0x130] sm:$0xff] %v690
      %745 = vst [vmem:[#allocation2 + $0x138] sm:$0xff] %v691
      %746 = vst [vmem:[#allocation2 + $0x140] sm:$0xff] %v692
      %747 = vst [vmem:[#allocation2 + $0x148] sm:$0xff] %v693
      %748 = vst [vmem:[#allocation2 + $0x150] sm:$0xff] %v694
      %749 = vst [vmem:[#allocation2 + $0x158] sm:$0xff] %v695
      %750 = vst [vmem:[#allocation2 + $0x160] sm:$0xff] %v696
      %751 = vst [vmem:[#allocation2 + $0x168] sm:$0xff] %v697
      %752 = vst [vmem:[#allocation2 + $0x170] sm:$0xff] %v698
      %753 = vst [vmem:[#allocation2 + $0x178] sm:$0xff] %v699
      %754 = vst [vmem:[#allocation2 + $0x180] sm:$0xff] %v700
      %755 = vst [vmem:[#allocation2 + $0x188] sm:$0xff] %v701
      %756 = vst [vmem:[#allocation2 + $0x190] sm:$0xff] %v702
      %757 = vst [vmem:[#allocation2 + $0x198] sm:$0xff] %v703
      %758 = vst [vmem:[#allocation2 + $0x1a0] sm:$0xff] %v704
      %759 = vst [vmem:[#allocation2 + $0x1a8] sm:$0xff] %v705
      %760 = vst [vmem:[#allocation2] sm:$0x1] 0.0
      %761 = vst [vmem:[#allocation2 + $0x18] sm:$0x1] 0.0
      %762 = vst [vmem:[#allocation2 + $0x30] sm:$0x1] 0.0
      %763 = vst [vmem:[#allocation2 + $0x48] sm:$0x1] 0.0
      %764 = vst [vmem:[#allocation2 + $0x60] sm:$0x1] 0.0
      %765 = vst [vmem:[#allocation2 + $0x78] sm:$0x1] 0.0
      %766 = vst [vmem:[#allocation2 + $0x90] sm:$0x1] 0.0
      %767 = vst [vmem:[#allocation2 + $0xa8] sm:$0x1] 0.0
      %768 = vst [vmem:[#allocation2 + $0xc0] sm:$0x1] 0.0
      %769 = vst [vmem:[#allocation2 + $0xd8] sm:$0x1] 0.0
      %770 = vst [vmem:[#allocation2 + $0xf0] sm:$0x1] 0.0
      %771 = vst [vmem:[#allocation2 + $0x108] sm:$0x1] 0.0
      %772 = vst [vmem:[#allocation2 + $0x120] sm:$0x1] 0.0
      %773 = vst [vmem:[#allocation2 + $0x138] sm:$0x1] 0.0
      %774 = vst [vmem:[#allocation2 + $0x150] sm:$0x1] 0.0
      %775 = vst [vmem:[#allocation2 + $0x168] sm:$0x1] 0.0
      %776 = vst [vmem:[#allocation2 + $0x180] sm:$0x1] 0.0
      %777 = vst [vmem:[#allocation2 + $0x198] sm:$0x1] 0.0
      %778 = vst [vmem:[#allocation2 + $0x11] sm:$0x1] 0.0
      %779 = vst [vmem:[#allocation2 + $0x29] sm:$0x1] 0.0
      %780 = vst [vmem:[#allocation2 + $0x41] sm:$0x1] 0.0
      %781 = vst [vmem:[#allocation2 + $0x59] sm:$0x1] 0.0
      %782 = vst [vmem:[#allocation2 + $0x71] sm:$0x1] 0.0
      %783 = vst [vmem:[#allocation2 + $0x89] sm:$0x1] 0.0
      %784 = vst [vmem:[#allocation2 + $0xa1] sm:$0x1] 0.0
      %785 = vst [vmem:[#allocation2 + $0xb9] sm:$0x1] 0.0
      %786 = vst [vmem:[#allocation2 + $0xd1] sm:$0x1] 0.0
      %787 = vst [vmem:[#allocation2 + $0xe9] sm:$0x1] 0.0
      %788 = vst [vmem:[#allocation2 + $0x101] sm:$0x1] 0.0
      %789 = vst [vmem:[#allocation2 + $0x119] sm:$0x1] 0.0
      %790 = vst [vmem:[#allocation2 + $0x131] sm:$0x1] 0.0
      %791 = vst [vmem:[#allocation2 + $0x149] sm:$0x1] 0.0
      %792 = vst [vmem:[#allocation2 + $0x161] sm:$0x1] 0.0
      %793 = vst [vmem:[#allocation2 + $0x179] sm:$0x1] 0.0
      %794 = vst [vmem:[#allocation2 + $0x191] sm:$0x1] 0.0
      %795 = vst [vmem:[#allocation2 + $0x1a9] sm:$0x1] 0.0
      %p796 = scmp.eq.s32.totalorder %s23, 0
      // Predicated region
      $region49: #{linear_bottleneck_forward.1} parent=47 // pred_check
        %p797 = pneg %p796
      $region50: #{linear_bottleneck_forward.1} parent=47 // pred_check_branch
        %799 = sbr.rel (%p797) target = $region52
      $region51: #{linear_bottleneck_forward.1} parent=47 // pred_region
        %800 = vst [vmem:[#allocation2] sm:$0xff] 0.0
        %801 = vst [vmem:[#allocation2 + $0x8] sm:$0xff] 0.0
        %802 = vst [vmem:[#allocation2 + $0x10] sm:$0xff] 0.0
        %s803 = scalar_lea.vmem [#allocation2], 408
        %804 = vst [vmem:[%s803] sm:$0xff] 0.0
        %805 = vst [vmem:[%s803 + $0x8] sm:$0xff] 0.0
        %806 = vst [vmem:[%s803 + $0x10] sm:$0xff] 0.0
      $region52: #{linear_bottleneck_forward.1} parent=47 // pred_fallthru
        _
      %v807 = vld [vmem:[#allocation2] sm:$0xff]
      %v808 = vld [vmem:[#allocation2 + $0x8] sm:$0xff]
      %v809 = vld [vmem:[#allocation2 + $0x18] sm:$0xff]
      %v810 = vld [vmem:[#allocation2 + $0x20] sm:$0xff]
      %v811 = vld [vmem:[#allocation2 + $0x30] sm:$0xff]
      %v812 = vld [vmem:[#allocation2 + $0x38] sm:$0xff]
      %v813 = vld [vmem:[#allocation2 + $0x48] sm:$0xff]
      %v814 = vld [vmem:[#allocation2 + $0x50] sm:$0xff]
      %v815 = vld [vmem:[#allocation2 + $0x60] sm:$0xff]
      %v816 = vld [vmem:[#allocation2 + $0x68] sm:$0xff]
      %v817 = vld [vmem:[#allocation2 + $0x78] sm:$0xff]
      %v818 = vld [vmem:[#allocation2 + $0x80] sm:$0xff]
      %v819 = vld [vmem:[#allocation2 + $0x90] sm:$0xff]
      %v820 = vld [vmem:[#allocation2 + $0x98] sm:$0xff]
      %v821 = vld [vmem:[#allocation2 + $0xa8] sm:$0xff]
      %v822 = vld [vmem:[#allocation2 + $0xb0] sm:$0xff]
      %v823 = vld [vmem:[#allocation2 + $0xc0] sm:$0xff]
      %v824 = vld [vmem:[#allocation2 + $0xc8] sm:$0xff]
      %v825 = vld [vmem:[#allocation2 + $0xd8] sm:$0xff]
      %v826 = vld [vmem:[#allocation2 + $0xe0] sm:$0xff]
      %v827 = vld [vmem:[#allocation2 + $0xf0] sm:$0xff]
      %v828 = vld [vmem:[#allocation2 + $0xf8] sm:$0xff]
      %v829 = vld [vmem:[#allocation2 + $0x108] sm:$0xff]
      %v830 = vld [vmem:[#allocation2 + $0x110] sm:$0xff]
      %v831 = vld [vmem:[#allocation2 + $0x120] sm:$0xff]
      %v832 = vld [vmem:[#allocation2 + $0x128] sm:$0xff]
      %v833 = vld [vmem:[#allocation2 + $0x138] sm:$0xff]
      %v834 = vld [vmem:[#allocation2 + $0x140] sm:$0xff]
      %v835 = vld [vmem:[#allocation2 + $0x150] sm:$0xff]
      %v836 = vld [vmem:[#allocation2 + $0x158] sm:$0xff]
      %v837 = vld [vmem:[#allocation2 + $0x168] sm:$0xff]
      %v838 = vld [vmem:[#allocation2 + $0x170] sm:$0xff]
      %v839 = vld [vmem:[%s3] sm:$0x1]
      %v840 = vperm.slane %v839, 0
      %v841 = vmul.f32 %v807, %v840
      %v842 = vmul.f32 %v808, %v840
      %v843 = vmul.f32 %v809, %v840
      %v844 = vmul.f32 %v810, %v840
      %v845 = vmul.f32 %v811, %v840
      %v846 = vmul.f32 %v812, %v840
      %v847 = vmul.f32 %v813, %v840
      %v848 = vmul.f32 %v814, %v840
      %v849 = vmul.f32 %v815, %v840
      %v850 = vmul.f32 %v816, %v840
      %v851 = vmul.f32 %v817, %v840
      %v852 = vmul.f32 %v818, %v840
      %v853 = vmul.f32 %v819, %v840
      %v854 = vmul.f32 %v820, %v840
      %v855 = vmul.f32 %v821, %v840
      %v856 = vmul.f32 %v822, %v840
      %v857 = vmul.f32 %v823, %v840
      %v858 = vmul.f32 %v824, %v840
      %v859 = vmul.f32 %v825, %v840
      %v860 = vmul.f32 %v826, %v840
      %v861 = vmul.f32 %v827, %v840
      %v862 = vmul.f32 %v828, %v840
      %v863 = vmul.f32 %v829, %v840
      %v864 = vmul.f32 %v830, %v840
      %v865 = vmul.f32 %v831, %v840
      %v866 = vmul.f32 %v832, %v840
      %v867 = vmul.f32 %v833, %v840
      %v868 = vmul.f32 %v834, %v840
      %v869 = vmul.f32 %v835, %v840
      %v870 = vmul.f32 %v836, %v840
      %v871 = vmul.f32 %v837, %v840
      %v872 = vmul.f32 %v838, %v840
      %v873 = vadd.f32 %v841, 0.0
      %v874 = vadd.f32 %v842, 0.0
      %v875 = vadd.f32 %v843, 0.0
      %v876 = vadd.f32 %v844, 0.0
      %v877 = vadd.f32 %v845, 0.0
      %v878 = vadd.f32 %v846, 0.0
      %v879 = vadd.f32 %v847, 0.0
      %v880 = vadd.f32 %v848, 0.0
      %v881 = vadd.f32 %v849, 0.0
      %v882 = vadd.f32 %v850, 0.0
      %v883 = vadd.f32 %v851, 0.0
      %v884 = vadd.f32 %v852, 0.0
      %v885 = vadd.f32 %v853, 0.0
      %v886 = vadd.f32 %v854, 0.0
      %v887 = vadd.f32 %v855, 0.0
      %v888 = vadd.f32 %v856, 0.0
      %v889 = vadd.f32 %v857, 0.0
      %v890 = vadd.f32 %v858, 0.0
      %v891 = vadd.f32 %v859, 0.0
      %v892 = vadd.f32 %v860, 0.0
      %v893 = vadd.f32 %v861, 0.0
      %v894 = vadd.f32 %v862, 0.0
      %v895 = vadd.f32 %v863, 0.0
      %v896 = vadd.f32 %v864, 0.0
      %v897 = vadd.f32 %v865, 0.0
      %v898 = vadd.f32 %v866, 0.0
      %v899 = vadd.f32 %v867, 0.0
      %v900 = vadd.f32 %v868, 0.0
      %v901 = vadd.f32 %v869, 0.0
      %v902 = vadd.f32 %v870, 0.0
      %v903 = vadd.f32 %v871, 0.0
      %v904 = vadd.f32 %v872, 0.0
      %v905 = vld [vmem:[#allocation2 + $0x1] sm:$0xff]
      %v906 = vld [vmem:[#allocation2 + $0x9] sm:$0xff]
      %v907 = vld [vmem:[#allocation2 + $0x19] sm:$0xff]
      %v908 = vld [vmem:[#allocation2 + $0x21] sm:$0xff]
      %v909 = vld [vmem:[#allocation2 + $0x31] sm:$0xff]
      %v910 = vld [vmem:[#allocation2 + $0x39] sm:$0xff]
      %v911 = vld [vmem:[#allocation2 + $0x49] sm:$0xff]
      %v912 = vld [vmem:[#allocation2 + $0x51] sm:$0xff]
      %v913 = vld [vmem:[#allocation2 + $0x61] sm:$0xff]
      %v914 = vld [vmem:[#allocation2 + $0x69] sm:$0xff]
      %v915 = vld [vmem:[#allocation2 + $0x79] sm:$0xff]
      %v916 = vld [vmem:[#allocation2 + $0x81] sm:$0xff]
      %v917 = vld [vmem:[#allocation2 + $0x91] sm:$0xff]
      %v918 = vld [vmem:[#allocation2 + $0x99] sm:$0xff]
      %v919 = vld [vmem:[#allocation2 + $0xa9] sm:$0xff]
      %v920 = vld [vmem:[#allocation2 + $0xb1] sm:$0xff]
      %v921 = vld [vmem:[#allocation2 + $0xc1] sm:$0xff]
      %v922 = vld [vmem:[#allocation2 + $0xc9] sm:$0xff]
      %v923 = vld [vmem:[#allocation2 + $0xd9] sm:$0xff]
      %v924 = vld [vmem:[#allocation2 + $0xe1] sm:$0xff]
      %v925 = vld [vmem:[#allocation2 + $0xf1] sm:$0xff]
      %v926 = vld [vmem:[#allocation2 + $0xf9] sm:$0xff]
      %v927 = vld [vmem:[#allocation2 + $0x109] sm:$0xff]
      %v928 = vld [vmem:[#allocation2 + $0x111] sm:$0xff]
      %v929 = vld [vmem:[#allocation2 + $0x121] sm:$0xff]
      %v930 = vld [vmem:[#allocation2 + $0x129] sm:$0xff]
      %v931 = vld [vmem:[#allocation2 + $0x139] sm:$0xff]
      %v932 = vld [vmem:[#allocation2 + $0x141] sm:$0xff]
      %v933 = vld [vmem:[#allocation2 + $0x151] sm:$0xff]
      %v934 = vld [vmem:[#allocation2 + $0x159] sm:$0xff]
      %v935 = vld [vmem:[#allocation2 + $0x169] sm:$0xff]
      %v936 = vld [vmem:[#allocation2 + $0x171] sm:$0xff]
      %v937 = vld [vmem:[%s3 + $0x1] sm:$0x1]
      %v938 = vperm.slane %v937, 0
      %v939 = vmul.f32 %v905, %v938
      %v940 = vmul.f32 %v906, %v938
      %v941 = vmul.f32 %v907, %v938
      %v942 = vmul.f32 %v908, %v938
      %v943 = vmul.f32 %v909, %v938
      %v944 = vmul.f32 %v910, %v938
      %v945 = vmul.f32 %v911, %v938
      %v946 = vmul.f32 %v912, %v938
      %v947 = vmul.f32 %v913, %v938
      %v948 = vmul.f32 %v914, %v938
      %v949 = vmul.f32 %v915, %v938
      %v950 = vmul.f32 %v916, %v938
      %v951 = vmul.f32 %v917, %v938
      %v952 = vmul.f32 %v918, %v938
      %v953 = vmul.f32 %v919, %v938
      %v954 = vmul.f32 %v920, %v938
      %v955 = vmul.f32 %v921, %v938
      %v956 = vmul.f32 %v922, %v938
      %v957 = vmul.f32 %v923, %v938
      %v958 = vmul.f32 %v924, %v938
      %v959 = vmul.f32 %v925, %v938
      %v960 = vmul.f32 %v926, %v938
      %v961 = vmul.f32 %v927, %v938
      %v962 = vmul.f32 %v928, %v938
      %v963 = vmul.f32 %v929, %v938
      %v964 = vmul.f32 %v930, %v938
      %v965 = vmul.f32 %v931, %v938
      %v966 = vmul.f32 %v932, %v938
      %v967 = vmul.f32 %v933, %v938
      %v968 = vmul.f32 %v934, %v938
      %v969 = vmul.f32 %v935, %v938
      %v970 = vmul.f32 %v936, %v938
      %v971 = vadd.f32 %v873, %v939
      %v972 = vadd.f32 %v874, %v940
      %v973 = vadd.f32 %v875, %v941
      %v974 = vadd.f32 %v876, %v942
      %v975 = vadd.f32 %v877, %v943
      %v976 = vadd.f32 %v878, %v944
      %v977 = vadd.f32 %v879, %v945
      %v978 = vadd.f32 %v880, %v946
      %v979 = vadd.f32 %v881, %v947
      %v980 = vadd.f32 %v882, %v948
      %v981 = vadd.f32 %v883, %v949
      %v982 = vadd.f32 %v884, %v950
      %v983 = vadd.f32 %v885, %v951
      %v984 = vadd.f32 %v886, %v952
      %v985 = vadd.f32 %v887, %v953
      %v986 = vadd.f32 %v888, %v954
      %v987 = vadd.f32 %v889, %v955
      %v988 = vadd.f32 %v890, %v956
      %v989 = vadd.f32 %v891, %v957
      %v990 = vadd.f32 %v892, %v958
      %v991 = vadd.f32 %v893, %v959
      %v992 = vadd.f32 %v894, %v960
      %v993 = vadd.f32 %v895, %v961
      %v994 = vadd.f32 %v896, %v962
      %v995 = vadd.f32 %v897, %v963
      %v996 = vadd.f32 %v898, %v964
      %v997 = vadd.f32 %v899, %v965
      %v998 = vadd.f32 %v900, %v966
      %v999 = vadd.f32 %v901, %v967
      %v1000 = vadd.f32 %v902, %v968
      %v1001 = vadd.f32 %v903, %v969
      %v1002 = vadd.f32 %v904, %v970
      %v1003 = vld [vmem:[#allocation2 + $0x2] sm:$0xff]
      %v1004 = vld [vmem:[#allocation2 + $0xa] sm:$0xff]
      %v1005 = vld [vmem:[#allocation2 + $0x1a] sm:$0xff]
      %v1006 = vld [vmem:[#allocation2 + $0x22] sm:$0xff]
      %v1007 = vld [vmem:[#allocation2 + $0x32] sm:$0xff]
      %v1008 = vld [vmem:[#allocation2 + $0x3a] sm:$0xff]
      %v1009 = vld [vmem:[#allocation2 + $0x4a] sm:$0xff]
      %v1010 = vld [vmem:[#allocation2 + $0x52] sm:$0xff]
      %v1011 = vld [vmem:[#allocation2 + $0x62] sm:$0xff]
      %v1012 = vld [vmem:[#allocation2 + $0x6a] sm:$0xff]
      %v1013 = vld [vmem:[#allocation2 + $0x7a] sm:$0xff]
      %v1014 = vld [vmem:[#allocation2 + $0x82] sm:$0xff]
      %v1015 = vld [vmem:[#allocation2 + $0x92] sm:$0xff]
      %v1016 = vld [vmem:[#allocation2 + $0x9a] sm:$0xff]
      %v1017 = vld [vmem:[#allocation2 + $0xaa] sm:$0xff]
      %v1018 = vld [vmem:[#allocation2 + $0xb2] sm:$0xff]
      %v1019 = vld [vmem:[#allocation2 + $0xc2] sm:$0xff]
      %v1020 = vld [vmem:[#allocation2 + $0xca] sm:$0xff]
      %v1021 = vld [vmem:[#allocation2 + $0xda] sm:$0xff]
      %v1022 = vld [vmem:[#allocation2 + $0xe2] sm:$0xff]
      %v1023 = vld [vmem:[#allocation2 + $0xf2] sm:$0xff]
      %v1024 = vld [vmem:[#allocation2 + $0xfa] sm:$0xff]
      %v1025 = vld [vmem:[#allocation2 + $0x10a] sm:$0xff]
      %v1026 = vld [vmem:[#allocation2 + $0x112] sm:$0xff]
      %v1027 = vld [vmem:[#allocation2 + $0x122] sm:$0xff]
      %v1028 = vld [vmem:[#allocation2 + $0x12a] sm:$0xff]
      %v1029 = vld [vmem:[#allocation2 + $0x13a] sm:$0xff]
      %v1030 = vld [vmem:[#allocation2 + $0x142] sm:$0xff]
      %v1031 = vld [vmem:[#allocation2 + $0x152] sm:$0xff]
      %v1032 = vld [vmem:[#allocation2 + $0x15a] sm:$0xff]
      %v1033 = vld [vmem:[#allocation2 + $0x16a] sm:$0xff]
      %v1034 = vld [vmem:[#allocation2 + $0x172] sm:$0xff]
      %v1035 = vld [vmem:[%s3 + $0x2] sm:$0x1]
      %v1036 = vperm.slane %v1035, 0
      %v1037 = vmul.f32 %v1003, %v1036
      %v1038 = vmul.f32 %v1004, %v1036
      %v1039 = vmul.f32 %v1005, %v1036
      %v1040 = vmul.f32 %v1006, %v1036
      %v1041 = vmul.f32 %v1007, %v1036
      %v1042 = vmul.f32 %v1008, %v1036
      %v1043 = vmul.f32 %v1009, %v1036
      %v1044 = vmul.f32 %v1010, %v1036
      %v1045 = vmul.f32 %v1011, %v1036
      %v1046 = vmul.f32 %v1012, %v1036
      %v1047 = vmul.f32 %v1013, %v1036
      %v1048 = vmul.f32 %v1014, %v1036
      %v1049 = vmul.f32 %v1015, %v1036
      %v1050 = vmul.f32 %v1016, %v1036
      %v1051 = vmul.f32 %v1017, %v1036
      %v1052 = vmul.f32 %v1018, %v1036
      %v1053 = vmul.f32 %v1019, %v1036
      %v1054 = vmul.f32 %v1020, %v1036
      %v1055 = vmul.f32 %v1021, %v1036
      %v1056 = vmul.f32 %v1022, %v1036
      %v1057 = vmul.f32 %v1023, %v1036
      %v1058 = vmul.f32 %v1024, %v1036
      %v1059 = vmul.f32 %v1025, %v1036
      %v1060 = vmul.f32 %v1026, %v1036
      %v1061 = vmul.f32 %v1027, %v1036
      %v1062 = vmul.f32 %v1028, %v1036
      %v1063 = vmul.f32 %v1029, %v1036
      %v1064 = vmul.f32 %v1030, %v1036
      %v1065 = vmul.f32 %v1031, %v1036
      %v1066 = vmul.f32 %v1032, %v1036
      %v1067 = vmul.f32 %v1033, %v1036
      %v1068 = vmul.f32 %v1034, %v1036
      %v1069 = vadd.f32 %v971, %v1037
      %v1070 = vadd.f32 %v972, %v1038
      %v1071 = vadd.f32 %v973, %v1039
      %v1072 = vadd.f32 %v974, %v1040
      %v1073 = vadd.f32 %v975, %v1041
      %v1074 = vadd.f32 %v976, %v1042
      %v1075 = vadd.f32 %v977, %v1043
      %v1076 = vadd.f32 %v978, %v1044
      %v1077 = vadd.f32 %v979, %v1045
      %v1078 = vadd.f32 %v980, %v1046
      %v1079 = vadd.f32 %v981, %v1047
      %v1080 = vadd.f32 %v982, %v1048
      %v1081 = vadd.f32 %v983, %v1049
      %v1082 = vadd.f32 %v984, %v1050
      %v1083 = vadd.f32 %v985, %v1051
      %v1084 = vadd.f32 %v986, %v1052
      %v1085 = vadd.f32 %v987, %v1053
      %v1086 = vadd.f32 %v988, %v1054
      %v1087 = vadd.f32 %v989, %v1055
      %v1088 = vadd.f32 %v990, %v1056
      %v1089 = vadd.f32 %v991, %v1057
      %v1090 = vadd.f32 %v992, %v1058
      %v1091 = vadd.f32 %v993, %v1059
      %v1092 = vadd.f32 %v994, %v1060
      %v1093 = vadd.f32 %v995, %v1061
      %v1094 = vadd.f32 %v996, %v1062
      %v1095 = vadd.f32 %v997, %v1063
      %v1096 = vadd.f32 %v998, %v1064
      %v1097 = vadd.f32 %v999, %v1065
      %v1098 = vadd.f32 %v1000, %v1066
      %v1099 = vadd.f32 %v1001, %v1067
      %v1100 = vadd.f32 %v1002, %v1068
      %s1101 = scalar_lea.vmem [#allocation2], 24
      %v1102 = vld [vmem:[%s1101] sm:$0xff]
      %v1103 = vld [vmem:[%s1101 + $0x8] sm:$0xff]
      %v1104 = vld [vmem:[%s1101 + $0x18] sm:$0xff]
      %v1105 = vld [vmem:[%s1101 + $0x20] sm:$0xff]
      %v1106 = vld [vmem:[%s1101 + $0x30] sm:$0xff]
      %v1107 = vld [vmem:[%s1101 + $0x38] sm:$0xff]
      %v1108 = vld [vmem:[%s1101 + $0x48] sm:$0xff]
      %v1109 = vld [vmem:[%s1101 + $0x50] sm:$0xff]
      %v1110 = vld [vmem:[%s1101 + $0x60] sm:$0xff]
      %v1111 = vld [vmem:[%s1101 + $0x68] sm:$0xff]
      %v1112 = vld [vmem:[%s1101 + $0x78] sm:$0xff]
      %v1113 = vld [vmem:[%s1101 + $0x80] sm:$0xff]
      %v1114 = vld [vmem:[%s1101 + $0x90] sm:$0xff]
      %v1115 = vld [vmem:[%s1101 + $0x98] sm:$0xff]
      %v1116 = vld [vmem:[%s1101 + $0xa8] sm:$0xff]
      %v1117 = vld [vmem:[%s1101 + $0xb0] sm:$0xff]
      %v1118 = vld [vmem:[%s1101 + $0xc0] sm:$0xff]
      %v1119 = vld [vmem:[%s1101 + $0xc8] sm:$0xff]
      %v1120 = vld [vmem:[%s1101 + $0xd8] sm:$0xff]
      %v1121 = vld [vmem:[%s1101 + $0xe0] sm:$0xff]
      %v1122 = vld [vmem:[%s1101 + $0xf0] sm:$0xff]
      %v1123 = vld [vmem:[%s1101 + $0xf8] sm:$0xff]
      %v1124 = vld [vmem:[%s1101 + $0x108] sm:$0xff]
      %v1125 = vld [vmem:[%s1101 + $0x110] sm:$0xff]
      %v1126 = vld [vmem:[%s1101 + $0x120] sm:$0xff]
      %v1127 = vld [vmem:[%s1101 + $0x128] sm:$0xff]
      %v1128 = vld [vmem:[%s1101 + $0x138] sm:$0xff]
      %v1129 = vld [vmem:[%s1101 + $0x140] sm:$0xff]
      %v1130 = vld [vmem:[%s1101 + $0x150] sm:$0xff]
      %v1131 = vld [vmem:[%s1101 + $0x158] sm:$0xff]
      %v1132 = vld [vmem:[%s1101 + $0x168] sm:$0xff]
      %v1133 = vld [vmem:[%s1101 + $0x170] sm:$0xff]
      %s1134 = scalar_lea.vmem %s3, 4
      %v1135 = vld [vmem:[%s1134] sm:$0x1]
      %v1136 = vperm.slane %v1135, 0
      %v1137 = vmul.f32 %v1102, %v1136
      %v1138 = vmul.f32 %v1103, %v1136
      %v1139 = vmul.f32 %v1104, %v1136
      %v1140 = vmul.f32 %v1105, %v1136
      %v1141 = vmul.f32 %v1106, %v1136
      %v1142 = vmul.f32 %v1107, %v1136
      %v1143 = vmul.f32 %v1108, %v1136
      %v1144 = vmul.f32 %v1109, %v1136
      %v1145 = vmul.f32 %v1110, %v1136
      %v1146 = vmul.f32 %v1111, %v1136
      %v1147 = vmul.f32 %v1112, %v1136
      %v1148 = vmul.f32 %v1113, %v1136
      %v1149 = vmul.f32 %v1114, %v1136
      %v1150 = vmul.f32 %v1115, %v1136
      %v1151 = vmul.f32 %v1116, %v1136
      %v1152 = vmul.f32 %v1117, %v1136
      %v1153 = vmul.f32 %v1118, %v1136
      %v1154 = vmul.f32 %v1119, %v1136
      %v1155 = vmul.f32 %v1120, %v1136
      %v1156 = vmul.f32 %v1121, %v1136
      %v1157 = vmul.f32 %v1122, %v1136
      %v1158 = vmul.f32 %v1123, %v1136
      %v1159 = vmul.f32 %v1124, %v1136
      %v1160 = vmul.f32 %v1125, %v1136
      %v1161 = vmul.f32 %v1126, %v1136
      %v1162 = vmul.f32 %v1127, %v1136
      %v1163 = vmul.f32 %v1128, %v1136
      %v1164 = vmul.f32 %v1129, %v1136
      %v1165 = vmul.f32 %v1130, %v1136
      %v1166 = vmul.f32 %v1131, %v1136
      %v1167 = vmul.f32 %v1132, %v1136
      %v1168 = vmul.f32 %v1133, %v1136
      %v1169 = vadd.f32 %v1069, %v1137
      %v1170 = vadd.f32 %v1070, %v1138
      %v1171 = vadd.f32 %v1071, %v1139
      %v1172 = vadd.f32 %v1072, %v1140
      %v1173 = vadd.f32 %v1073, %v1141
      %v1174 = vadd.f32 %v1074, %v1142
      %v1175 = vadd.f32 %v1075, %v1143
      %v1176 = vadd.f32 %v1076, %v1144
      %v1177 = vadd.f32 %v1077, %v1145
      %v1178 = vadd.f32 %v1078, %v1146
      %v1179 = vadd.f32 %v1079, %v1147
      %v1180 = vadd.f32 %v1080, %v1148
      %v1181 = vadd.f32 %v1081, %v1149
      %v1182 = vadd.f32 %v1082, %v1150
      %v1183 = vadd.f32 %v1083, %v1151
      %v1184 = vadd.f32 %v1084, %v1152
      %v1185 = vadd.f32 %v1085, %v1153
      %v1186 = vadd.f32 %v1086, %v1154
      %v1187 = vadd.f32 %v1087, %v1155
      %v1188 = vadd.f32 %v1088, %v1156
      %v1189 = vadd.f32 %v1089, %v1157
      %v1190 = vadd.f32 %v1090, %v1158
      %v1191 = vadd.f32 %v1091, %v1159
      %v1192 = vadd.f32 %v1092, %v1160
      %v1193 = vadd.f32 %v1093, %v1161
      %v1194 = vadd.f32 %v1094, %v1162
      %v1195 = vadd.f32 %v1095, %v1163
      %v1196 = vadd.f32 %v1096, %v1164
      %v1197 = vadd.f32 %v1097, %v1165
      %v1198 = vadd.f32 %v1098, %v1166
      %v1199 = vadd.f32 %v1099, %v1167
      %v1200 = vadd.f32 %v1100, %v1168
      %v1201 = vld [vmem:[%s1101 + $0x1] sm:$0xff]
      %v1202 = vld [vmem:[%s1101 + $0x9] sm:$0xff]
      %v1203 = vld [vmem:[%s1101 + $0x19] sm:$0xff]
      %v1204 = vld [vmem:[%s1101 + $0x21] sm:$0xff]
      %v1205 = vld [vmem:[%s1101 + $0x31] sm:$0xff]
      %v1206 = vld [vmem:[%s1101 + $0x39] sm:$0xff]
      %v1207 = vld [vmem:[%s1101 + $0x49] sm:$0xff]
      %v1208 = vld [vmem:[%s1101 + $0x51] sm:$0xff]
      %v1209 = vld [vmem:[%s1101 + $0x61] sm:$0xff]
      %v1210 = vld [vmem:[%s1101 + $0x69] sm:$0xff]
      %v1211 = vld [vmem:[%s1101 + $0x79] sm:$0xff]
      %v1212 = vld [vmem:[%s1101 + $0x81] sm:$0xff]
      %v1213 = vld [vmem:[%s1101 + $0x91] sm:$0xff]
      %v1214 = vld [vmem:[%s1101 + $0x99] sm:$0xff]
      %v1215 = vld [vmem:[%s1101 + $0xa9] sm:$0xff]
      %v1216 = vld [vmem:[%s1101 + $0xb1] sm:$0xff]
      %v1217 = vld [vmem:[%s1101 + $0xc1] sm:$0xff]
      %v1218 = vld [vmem:[%s1101 + $0xc9] sm:$0xff]
      %v1219 = vld [vmem:[%s1101 + $0xd9] sm:$0xff]
      %v1220 = vld [vmem:[%s1101 + $0xe1] sm:$0xff]
      %v1221 = vld [vmem:[%s1101 + $0xf1] sm:$0xff]
      %v1222 = vld [vmem:[%s1101 + $0xf9] sm:$0xff]
      %v1223 = vld [vmem:[%s1101 + $0x109] sm:$0xff]
      %v1224 = vld [vmem:[%s1101 + $0x111] sm:$0xff]
      %v1225 = vld [vmem:[%s1101 + $0x121] sm:$0xff]
      %v1226 = vld [vmem:[%s1101 + $0x129] sm:$0xff]
      %v1227 = vld [vmem:[%s1101 + $0x139] sm:$0xff]
      %v1228 = vld [vmem:[%s1101 + $0x141] sm:$0xff]
      %v1229 = vld [vmem:[%s1101 + $0x151] sm:$0xff]
      %v1230 = vld [vmem:[%s1101 + $0x159] sm:$0xff]
      %v1231 = vld [vmem:[%s1101 + $0x169] sm:$0xff]
      %v1232 = vld [vmem:[%s1101 + $0x171] sm:$0xff]
      %v1233 = vld [vmem:[%s1134 + $0x1] sm:$0x1]
      %v1234 = vperm.slane %v1233, 0
      %v1235 = vmul.f32 %v1201, %v1234
      %v1236 = vmul.f32 %v1202, %v1234
      %v1237 = vmul.f32 %v1203, %v1234
      %v1238 = vmul.f32 %v1204, %v1234
      %v1239 = vmul.f32 %v1205, %v1234
      %v1240 = vmul.f32 %v1206, %v1234
      %v1241 = vmul.f32 %v1207, %v1234
      %v1242 = vmul.f32 %v1208, %v1234
      %v1243 = vmul.f32 %v1209, %v1234
      %v1244 = vmul.f32 %v1210, %v1234
      %v1245 = vmul.f32 %v1211, %v1234
      %v1246 = vmul.f32 %v1212, %v1234
      %v1247 = vmul.f32 %v1213, %v1234
      %v1248 = vmul.f32 %v1214, %v1234
      %v1249 = vmul.f32 %v1215, %v1234
      %v1250 = vmul.f32 %v1216, %v1234
      %v1251 = vmul.f32 %v1217, %v1234
      %v1252 = vmul.f32 %v1218, %v1234
      %v1253 = vmul.f32 %v1219, %v1234
      %v1254 = vmul.f32 %v1220, %v1234
      %v1255 = vmul.f32 %v1221, %v1234
      %v1256 = vmul.f32 %v1222, %v1234
      %v1257 = vmul.f32 %v1223, %v1234
      %v1258 = vmul.f32 %v1224, %v1234
      %v1259 = vmul.f32 %v1225, %v1234
      %v1260 = vmul.f32 %v1226, %v1234
      %v1261 = vmul.f32 %v1227, %v1234
      %v1262 = vmul.f32 %v1228, %v1234
      %v1263 = vmul.f32 %v1229, %v1234
      %v1264 = vmul.f32 %v1230, %v1234
      %v1265 = vmul.f32 %v1231, %v1234
      %v1266 = vmul.f32 %v1232, %v1234
      %v1267 = vadd.f32 %v1169, %v1235
      %v1268 = vadd.f32 %v1170, %v1236
      %v1269 = vadd.f32 %v1171, %v1237
      %v1270 = vadd.f32 %v1172, %v1238
      %v1271 = vadd.f32 %v1173, %v1239
      %v1272 = vadd.f32 %v1174, %v1240
      %v1273 = vadd.f32 %v1175, %v1241
      %v1274 = vadd.f32 %v1176, %v1242
      %v1275 = vadd.f32 %v1177, %v1243
      %v1276 = vadd.f32 %v1178, %v1244
      %v1277 = vadd.f32 %v1179, %v1245
      %v1278 = vadd.f32 %v1180, %v1246
      %v1279 = vadd.f32 %v1181, %v1247
      %v1280 = vadd.f32 %v1182, %v1248
      %v1281 = vadd.f32 %v1183, %v1249
      %v1282 = vadd.f32 %v1184, %v1250
      %v1283 = vadd.f32 %v1185, %v1251
      %v1284 = vadd.f32 %v1186, %v1252
      %v1285 = vadd.f32 %v1187, %v1253
      %v1286 = vadd.f32 %v1188, %v1254
      %v1287 = vadd.f32 %v1189, %v1255
      %v1288 = vadd.f32 %v1190, %v1256
      %v1289 = vadd.f32 %v1191, %v1257
      %v1290 = vadd.f32 %v1192, %v1258
      %v1291 = vadd.f32 %v1193, %v1259
      %v1292 = vadd.f32 %v1194, %v1260
      %v1293 = vadd.f32 %v1195, %v1261
      %v1294 = vadd.f32 %v1196, %v1262
      %v1295 = vadd.f32 %v1197, %v1263
      %v1296 = vadd.f32 %v1198, %v1264
      %v1297 = vadd.f32 %v1199, %v1265
      %v1298 = vadd.f32 %v1200, %v1266
      %v1299 = vld [vmem:[%s1101 + $0x2] sm:$0xff]
      %v1300 = vld [vmem:[%s1101 + $0xa] sm:$0xff]
      %v1301 = vld [vmem:[%s1101 + $0x1a] sm:$0xff]
      %v1302 = vld [vmem:[%s1101 + $0x22] sm:$0xff]
      %v1303 = vld [vmem:[%s1101 + $0x32] sm:$0xff]
      %v1304 = vld [vmem:[%s1101 + $0x3a] sm:$0xff]
      %v1305 = vld [vmem:[%s1101 + $0x4a] sm:$0xff]
      %v1306 = vld [vmem:[%s1101 + $0x52] sm:$0xff]
      %v1307 = vld [vmem:[%s1101 + $0x62] sm:$0xff]
      %v1308 = vld [vmem:[%s1101 + $0x6a] sm:$0xff]
      %v1309 = vld [vmem:[%s1101 + $0x7a] sm:$0xff]
      %v1310 = vld [vmem:[%s1101 + $0x82] sm:$0xff]
      %v1311 = vld [vmem:[%s1101 + $0x92] sm:$0xff]
      %v1312 = vld [vmem:[%s1101 + $0x9a] sm:$0xff]
      %v1313 = vld [vmem:[%s1101 + $0xaa] sm:$0xff]
      %v1314 = vld [vmem:[%s1101 + $0xb2] sm:$0xff]
      %v1315 = vld [vmem:[%s1101 + $0xc2] sm:$0xff]
      %v1316 = vld [vmem:[%s1101 + $0xca] sm:$0xff]
      %v1317 = vld [vmem:[%s1101 + $0xda] sm:$0xff]
      %v1318 = vld [vmem:[%s1101 + $0xe2] sm:$0xff]
      %v1319 = vld [vmem:[%s1101 + $0xf2] sm:$0xff]
      %v1320 = vld [vmem:[%s1101 + $0xfa] sm:$0xff]
      %v1321 = vld [vmem:[%s1101 + $0x10a] sm:$0xff]
      %v1322 = vld [vmem:[%s1101 + $0x112] sm:$0xff]
      %v1323 = vld [vmem:[%s1101 + $0x122] sm:$0xff]
      %v1324 = vld [vmem:[%s1101 + $0x12a] sm:$0xff]
      %v1325 = vld [vmem:[%s1101 + $0x13a] sm:$0xff]
      %v1326 = vld [vmem:[%s1101 + $0x142] sm:$0xff]
      %v1327 = vld [vmem:[%s1101 + $0x152] sm:$0xff]
      %v1328 = vld [vmem:[%s1101 + $0x15a] sm:$0xff]
      %v1329 = vld [vmem:[%s1101 + $0x16a] sm:$0xff]
      %v1330 = vld [vmem:[%s1101 + $0x172] sm:$0xff]
      %v1331 = vld [vmem:[%s1134 + $0x2] sm:$0x1]
      %v1332 = vperm.slane %v1331, 0
      %v1333 = vmul.f32 %v1299, %v1332
      %v1334 = vmul.f32 %v1300, %v1332
      %v1335 = vmul.f32 %v1301, %v1332
      %v1336 = vmul.f32 %v1302, %v1332
      %v1337 = vmul.f32 %v1303, %v1332
      %v1338 = vmul.f32 %v1304, %v1332
      %v1339 = vmul.f32 %v1305, %v1332
      %v1340 = vmul.f32 %v1306, %v1332
      %v1341 = vmul.f32 %v1307, %v1332
      %v1342 = vmul.f32 %v1308, %v1332
      %v1343 = vmul.f32 %v1309, %v1332
      %v1344 = vmul.f32 %v1310, %v1332
      %v1345 = vmul.f32 %v1311, %v1332
      %v1346 = vmul.f32 %v1312, %v1332
      %v1347 = vmul.f32 %v1313, %v1332
      %v1348 = vmul.f32 %v1314, %v1332
      %v1349 = vmul.f32 %v1315, %v1332
      %v1350 = vmul.f32 %v1316, %v1332
      %v1351 = vmul.f32 %v1317, %v1332
      %v1352 = vmul.f32 %v1318, %v1332
      %v1353 = vmul.f32 %v1319, %v1332
      %v1354 = vmul.f32 %v1320, %v1332
      %v1355 = vmul.f32 %v1321, %v1332
      %v1356 = vmul.f32 %v1322, %v1332
      %v1357 = vmul.f32 %v1323, %v1332
      %v1358 = vmul.f32 %v1324, %v1332
      %v1359 = vmul.f32 %v1325, %v1332
      %v1360 = vmul.f32 %v1326, %v1332
      %v1361 = vmul.f32 %v1327, %v1332
      %v1362 = vmul.f32 %v1328, %v1332
      %v1363 = vmul.f32 %v1329, %v1332
      %v1364 = vmul.f32 %v1330, %v1332
      %v1365 = vadd.f32 %v1267, %v1333
      %v1366 = vadd.f32 %v1268, %v1334
      %v1367 = vadd.f32 %v1269, %v1335
      %v1368 = vadd.f32 %v1270, %v1336
      %v1369 = vadd.f32 %v1271, %v1337
      %v1370 = vadd.f32 %v1272, %v1338
      %v1371 = vadd.f32 %v1273, %v1339
      %v1372 = vadd.f32 %v1274, %v1340
      %v1373 = vadd.f32 %v1275, %v1341
      %v1374 = vadd.f32 %v1276, %v1342
      %v1375 = vadd.f32 %v1277, %v1343
      %v1376 = vadd.f32 %v1278, %v1344
      %v1377 = vadd.f32 %v1279, %v1345
      %v1378 = vadd.f32 %v1280, %v1346
      %v1379 = vadd.f32 %v1281, %v1347
      %v1380 = vadd.f32 %v1282, %v1348
      %v1381 = vadd.f32 %v1283, %v1349
      %v1382 = vadd.f32 %v1284, %v1350
      %v1383 = vadd.f32 %v1285, %v1351
      %v1384 = vadd.f32 %v1286, %v1352
      %v1385 = vadd.f32 %v1287, %v1353
      %v1386 = vadd.f32 %v1288, %v1354
      %v1387 = vadd.f32 %v1289, %v1355
      %v1388 = vadd.f32 %v1290, %v1356
      %v1389 = vadd.f32 %v1291, %v1357
      %v1390 = vadd.f32 %v1292, %v1358
      %v1391 = vadd.f32 %v1293, %v1359
      %v1392 = vadd.f32 %v1294, %v1360
      %v1393 = vadd.f32 %v1295, %v1361
      %v1394 = vadd.f32 %v1296, %v1362
      %v1395 = vadd.f32 %v1297, %v1363
      %v1396 = vadd.f32 %v1298, %v1364
      %s1397 = scalar_lea.vmem [#allocation2], 48
      %v1398 = vld [vmem:[%s1397] sm:$0xff]
      %v1399 = vld [vmem:[%s1397 + $0x8] sm:$0xff]
      %v1400 = vld [vmem:[%s1397 + $0x18] sm:$0xff]
      %v1401 = vld [vmem:[%s1397 + $0x20] sm:$0xff]
      %v1402 = vld [vmem:[%s1397 + $0x30] sm:$0xff]
      %v1403 = vld [vmem:[%s1397 + $0x38] sm:$0xff]
      %v1404 = vld [vmem:[%s1397 + $0x48] sm:$0xff]
      %v1405 = vld [vmem:[%s1397 + $0x50] sm:$0xff]
      %v1406 = vld [vmem:[%s1397 + $0x60] sm:$0xff]
      %v1407 = vld [vmem:[%s1397 + $0x68] sm:$0xff]
      %v1408 = vld [vmem:[%s1397 + $0x78] sm:$0xff]
      %v1409 = vld [vmem:[%s1397 + $0x80] sm:$0xff]
      %v1410 = vld [vmem:[%s1397 + $0x90] sm:$0xff]
      %v1411 = vld [vmem:[%s1397 + $0x98] sm:$0xff]
      %v1412 = vld [vmem:[%s1397 + $0xa8] sm:$0xff]
      %v1413 = vld [vmem:[%s1397 + $0xb0] sm:$0xff]
      %v1414 = vld [vmem:[%s1397 + $0xc0] sm:$0xff]
      %v1415 = vld [vmem:[%s1397 + $0xc8] sm:$0xff]
      %v1416 = vld [vmem:[%s1397 + $0xd8] sm:$0xff]
      %v1417 = vld [vmem:[%s1397 + $0xe0] sm:$0xff]
      %v1418 = vld [vmem:[%s1397 + $0xf0] sm:$0xff]
      %v1419 = vld [vmem:[%s1397 + $0xf8] sm:$0xff]
      %v1420 = vld [vmem:[%s1397 + $0x108] sm:$0xff]
      %v1421 = vld [vmem:[%s1397 + $0x110] sm:$0xff]
      %v1422 = vld [vmem:[%s1397 + $0x120] sm:$0xff]
      %v1423 = vld [vmem:[%s1397 + $0x128] sm:$0xff]
      %v1424 = vld [vmem:[%s1397 + $0x138] sm:$0xff]
      %v1425 = vld [vmem:[%s1397 + $0x140] sm:$0xff]
      %v1426 = vld [vmem:[%s1397 + $0x150] sm:$0xff]
      %v1427 = vld [vmem:[%s1397 + $0x158] sm:$0xff]
      %v1428 = vld [vmem:[%s1397 + $0x168] sm:$0xff]
      %v1429 = vld [vmem:[%s1397 + $0x170] sm:$0xff]
      %s1430 = scalar_lea.vmem %s3, 8
      %v1431 = vld [vmem:[%s1430] sm:$0x1]
      %v1432 = vperm.slane %v1431, 0
      %v1433 = vmul.f32 %v1398, %v1432
      %v1434 = vmul.f32 %v1399, %v1432
      %v1435 = vmul.f32 %v1400, %v1432
      %v1436 = vmul.f32 %v1401, %v1432
      %v1437 = vmul.f32 %v1402, %v1432
      %v1438 = vmul.f32 %v1403, %v1432
      %v1439 = vmul.f32 %v1404, %v1432
      %v1440 = vmul.f32 %v1405, %v1432
      %v1441 = vmul.f32 %v1406, %v1432
      %v1442 = vmul.f32 %v1407, %v1432
      %v1443 = vmul.f32 %v1408, %v1432
      %v1444 = vmul.f32 %v1409, %v1432
      %v1445 = vmul.f32 %v1410, %v1432
      %v1446 = vmul.f32 %v1411, %v1432
      %v1447 = vmul.f32 %v1412, %v1432
      %v1448 = vmul.f32 %v1413, %v1432
      %v1449 = vmul.f32 %v1414, %v1432
      %v1450 = vmul.f32 %v1415, %v1432
      %v1451 = vmul.f32 %v1416, %v1432
      %v1452 = vmul.f32 %v1417, %v1432
      %v1453 = vmul.f32 %v1418, %v1432
      %v1454 = vmul.f32 %v1419, %v1432
      %v1455 = vmul.f32 %v1420, %v1432
      %v1456 = vmul.f32 %v1421, %v1432
      %v1457 = vmul.f32 %v1422, %v1432
      %v1458 = vmul.f32 %v1423, %v1432
      %v1459 = vmul.f32 %v1424, %v1432
      %v1460 = vmul.f32 %v1425, %v1432
      %v1461 = vmul.f32 %v1426, %v1432
      %v1462 = vmul.f32 %v1427, %v1432
      %v1463 = vmul.f32 %v1428, %v1432
      %v1464 = vmul.f32 %v1429, %v1432
      %v1465 = vadd.f32 %v1365, %v1433
      %v1466 = vadd.f32 %v1366, %v1434
      %v1467 = vadd.f32 %v1367, %v1435
      %v1468 = vadd.f32 %v1368, %v1436
      %v1469 = vadd.f32 %v1369, %v1437
      %v1470 = vadd.f32 %v1370, %v1438
      %v1471 = vadd.f32 %v1371, %v1439
      %v1472 = vadd.f32 %v1372, %v1440
      %v1473 = vadd.f32 %v1373, %v1441
      %v1474 = vadd.f32 %v1374, %v1442
      %v1475 = vadd.f32 %v1375, %v1443
      %v1476 = vadd.f32 %v1376, %v1444
      %v1477 = vadd.f32 %v1377, %v1445
      %v1478 = vadd.f32 %v1378, %v1446
      %v1479 = vadd.f32 %v1379, %v1447
      %v1480 = vadd.f32 %v1380, %v1448
      %v1481 = vadd.f32 %v1381, %v1449
      %v1482 = vadd.f32 %v1382, %v1450
      %v1483 = vadd.f32 %v1383, %v1451
      %v1484 = vadd.f32 %v1384, %v1452
      %v1485 = vadd.f32 %v1385, %v1453
      %v1486 = vadd.f32 %v1386, %v1454
      %v1487 = vadd.f32 %v1387, %v1455
      %v1488 = vadd.f32 %v1388, %v1456
      %v1489 = vadd.f32 %v1389, %v1457
      %v1490 = vadd.f32 %v1390, %v1458
      %v1491 = vadd.f32 %v1391, %v1459
      %v1492 = vadd.f32 %v1392, %v1460
      %v1493 = vadd.f32 %v1393, %v1461
      %v1494 = vadd.f32 %v1394, %v1462
      %v1495 = vadd.f32 %v1395, %v1463
      %v1496 = vadd.f32 %v1396, %v1464
      %v1497 = vld [vmem:[%s1397 + $0x1] sm:$0xff]
      %v1498 = vld [vmem:[%s1397 + $0x9] sm:$0xff]
      %v1499 = vld [vmem:[%s1397 + $0x19] sm:$0xff]
      %v1500 = vld [vmem:[%s1397 + $0x21] sm:$0xff]
      %v1501 = vld [vmem:[%s1397 + $0x31] sm:$0xff]
      %v1502 = vld [vmem:[%s1397 + $0x39] sm:$0xff]
      %v1503 = vld [vmem:[%s1397 + $0x49] sm:$0xff]
      %v1504 = vld [vmem:[%s1397 + $0x51] sm:$0xff]
      %v1505 = vld [vmem:[%s1397 + $0x61] sm:$0xff]
      %v1506 = vld [vmem:[%s1397 + $0x69] sm:$0xff]
      %v1507 = vld [vmem:[%s1397 + $0x79] sm:$0xff]
      %v1508 = vld [vmem:[%s1397 + $0x81] sm:$0xff]
      %v1509 = vld [vmem:[%s1397 + $0x91] sm:$0xff]
      %v1510 = vld [vmem:[%s1397 + $0x99] sm:$0xff]
      %v1511 = vld [vmem:[%s1397 + $0xa9] sm:$0xff]
      %v1512 = vld [vmem:[%s1397 + $0xb1] sm:$0xff]
      %v1513 = vld [vmem:[%s1397 + $0xc1] sm:$0xff]
      %v1514 = vld [vmem:[%s1397 + $0xc9] sm:$0xff]
      %v1515 = vld [vmem:[%s1397 + $0xd9] sm:$0xff]
      %v1516 = vld [vmem:[%s1397 + $0xe1] sm:$0xff]
      %v1517 = vld [vmem:[%s1397 + $0xf1] sm:$0xff]
      %v1518 = vld [vmem:[%s1397 + $0xf9] sm:$0xff]
      %v1519 = vld [vmem:[%s1397 + $0x109] sm:$0xff]
      %v1520 = vld [vmem:[%s1397 + $0x111] sm:$0xff]
      %v1521 = vld [vmem:[%s1397 + $0x121] sm:$0xff]
      %v1522 = vld [vmem:[%s1397 + $0x129] sm:$0xff]
      %v1523 = vld [vmem:[%s1397 + $0x139] sm:$0xff]
      %v1524 = vld [vmem:[%s1397 + $0x141] sm:$0xff]
      %v1525 = vld [vmem:[%s1397 + $0x151] sm:$0xff]
      %v1526 = vld [vmem:[%s1397 + $0x159] sm:$0xff]
      %v1527 = vld [vmem:[%s1397 + $0x169] sm:$0xff]
      %v1528 = vld [vmem:[%s1397 + $0x171] sm:$0xff]
      %v1529 = vld [vmem:[%s1430 + $0x1] sm:$0x1]
      %v1530 = vperm.slane %v1529, 0
      %v1531 = vmul.f32 %v1497, %v1530
      %v1532 = vmul.f32 %v1498, %v1530
      %v1533 = vmul.f32 %v1499, %v1530
      %v1534 = vmul.f32 %v1500, %v1530
      %v1535 = vmul.f32 %v1501, %v1530
      %v1536 = vmul.f32 %v1502, %v1530
      %v1537 = vmul.f32 %v1503, %v1530
      %v1538 = vmul.f32 %v1504, %v1530
      %v1539 = vmul.f32 %v1505, %v1530
      %v1540 = vmul.f32 %v1506, %v1530
      %v1541 = vmul.f32 %v1507, %v1530
      %v1542 = vmul.f32 %v1508, %v1530
      %v1543 = vmul.f32 %v1509, %v1530
      %v1544 = vmul.f32 %v1510, %v1530
      %v1545 = vmul.f32 %v1511, %v1530
      %v1546 = vmul.f32 %v1512, %v1530
      %v1547 = vmul.f32 %v1513, %v1530
      %v1548 = vmul.f32 %v1514, %v1530
      %v1549 = vmul.f32 %v1515, %v1530
      %v1550 = vmul.f32 %v1516, %v1530
      %v1551 = vmul.f32 %v1517, %v1530
      %v1552 = vmul.f32 %v1518, %v1530
      %v1553 = vmul.f32 %v1519, %v1530
      %v1554 = vmul.f32 %v1520, %v1530
      %v1555 = vmul.f32 %v1521, %v1530
      %v1556 = vmul.f32 %v1522, %v1530
      %v1557 = vmul.f32 %v1523, %v1530
      %v1558 = vmul.f32 %v1524, %v1530
      %v1559 = vmul.f32 %v1525, %v1530
      %v1560 = vmul.f32 %v1526, %v1530
      %v1561 = vmul.f32 %v1527, %v1530
      %v1562 = vmul.f32 %v1528, %v1530
      %v1563 = vadd.f32 %v1465, %v1531
      %v1564 = vadd.f32 %v1466, %v1532
      %v1565 = vadd.f32 %v1467, %v1533
      %v1566 = vadd.f32 %v1468, %v1534
      %v1567 = vadd.f32 %v1469, %v1535
      %v1568 = vadd.f32 %v1470, %v1536
      %v1569 = vadd.f32 %v1471, %v1537
      %v1570 = vadd.f32 %v1472, %v1538
      %v1571 = vadd.f32 %v1473, %v1539
      %v1572 = vadd.f32 %v1474, %v1540
      %v1573 = vadd.f32 %v1475, %v1541
      %v1574 = vadd.f32 %v1476, %v1542
      %v1575 = vadd.f32 %v1477, %v1543
      %v1576 = vadd.f32 %v1478, %v1544
      %v1577 = vadd.f32 %v1479, %v1545
      %v1578 = vadd.f32 %v1480, %v1546
      %v1579 = vadd.f32 %v1481, %v1547
      %v1580 = vadd.f32 %v1482, %v1548
      %v1581 = vadd.f32 %v1483, %v1549
      %v1582 = vadd.f32 %v1484, %v1550
      %v1583 = vadd.f32 %v1485, %v1551
      %v1584 = vadd.f32 %v1486, %v1552
      %v1585 = vadd.f32 %v1487, %v1553
      %v1586 = vadd.f32 %v1488, %v1554
      %v1587 = vadd.f32 %v1489, %v1555
      %v1588 = vadd.f32 %v1490, %v1556
      %v1589 = vadd.f32 %v1491, %v1557
      %v1590 = vadd.f32 %v1492, %v1558
      %v1591 = vadd.f32 %v1493, %v1559
      %v1592 = vadd.f32 %v1494, %v1560
      %v1593 = vadd.f32 %v1495, %v1561
      %v1594 = vadd.f32 %v1496, %v1562
      %v1595 = vld [vmem:[%s1397 + $0x2] sm:$0xff]
      %v1596 = vld [vmem:[%s1397 + $0xa] sm:$0xff]
      %v1597 = vld [vmem:[%s1397 + $0x1a] sm:$0xff]
      %v1598 = vld [vmem:[%s1397 + $0x22] sm:$0xff]
      %v1599 = vld [vmem:[%s1397 + $0x32] sm:$0xff]
      %v1600 = vld [vmem:[%s1397 + $0x3a] sm:$0xff]
      %v1601 = vld [vmem:[%s1397 + $0x4a] sm:$0xff]
      %v1602 = vld [vmem:[%s1397 + $0x52] sm:$0xff]
      %v1603 = vld [vmem:[%s1397 + $0x62] sm:$0xff]
      %v1604 = vld [vmem:[%s1397 + $0x6a] sm:$0xff]
      %v1605 = vld [vmem:[%s1397 + $0x7a] sm:$0xff]
      %v1606 = vld [vmem:[%s1397 + $0x82] sm:$0xff]
      %v1607 = vld [vmem:[%s1397 + $0x92] sm:$0xff]
      %v1608 = vld [vmem:[%s1397 + $0x9a] sm:$0xff]
      %v1609 = vld [vmem:[%s1397 + $0xaa] sm:$0xff]
      %v1610 = vld [vmem:[%s1397 + $0xb2] sm:$0xff]
      %v1611 = vld [vmem:[%s1397 + $0xc2] sm:$0xff]
      %v1612 = vld [vmem:[%s1397 + $0xca] sm:$0xff]
      %v1613 = vld [vmem:[%s1397 + $0xda] sm:$0xff]
      %v1614 = vld [vmem:[%s1397 + $0xe2] sm:$0xff]
      %v1615 = vld [vmem:[%s1397 + $0xf2] sm:$0xff]
      %v1616 = vld [vmem:[%s1397 + $0xfa] sm:$0xff]
      %v1617 = vld [vmem:[%s1397 + $0x10a] sm:$0xff]
      %v1618 = vld [vmem:[%s1397 + $0x112] sm:$0xff]
      %v1619 = vld [vmem:[%s1397 + $0x122] sm:$0xff]
      %v1620 = vld [vmem:[%s1397 + $0x12a] sm:$0xff]
      %v1621 = vld [vmem:[%s1397 + $0x13a] sm:$0xff]
      %v1622 = vld [vmem:[%s1397 + $0x142] sm:$0xff]
      %v1623 = vld [vmem:[%s1397 + $0x152] sm:$0xff]
      %v1624 = vld [vmem:[%s1397 + $0x15a] sm:$0xff]
      %v1625 = vld [vmem:[%s1397 + $0x16a] sm:$0xff]
      %v1626 = vld [vmem:[%s1397 + $0x172] sm:$0xff]
      %v1627 = vld [vmem:[%s1430 + $0x2] sm:$0x1]
      %v1628 = vperm.slane %v1627, 0
      %v1629 = vmul.f32 %v1595, %v1628
      %v1630 = vmul.f32 %v1596, %v1628
      %v1631 = vmul.f32 %v1597, %v1628
      %v1632 = vmul.f32 %v1598, %v1628
      %v1633 = vmul.f32 %v1599, %v1628
      %v1634 = vmul.f32 %v1600, %v1628
      %v1635 = vmul.f32 %v1601, %v1628
      %v1636 = vmul.f32 %v1602, %v1628
      %v1637 = vmul.f32 %v1603, %v1628
      %v1638 = vmul.f32 %v1604, %v1628
      %v1639 = vmul.f32 %v1605, %v1628
      %v1640 = vmul.f32 %v1606, %v1628
      %v1641 = vmul.f32 %v1607, %v1628
      %v1642 = vmul.f32 %v1608, %v1628
      %v1643 = vmul.f32 %v1609, %v1628
      %v1644 = vmul.f32 %v1610, %v1628
      %v1645 = vmul.f32 %v1611, %v1628
      %v1646 = vmul.f32 %v1612, %v1628
      %v1647 = vmul.f32 %v1613, %v1628
      %v1648 = vmul.f32 %v1614, %v1628
      %v1649 = vmul.f32 %v1615, %v1628
      %v1650 = vmul.f32 %v1616, %v1628
      %v1651 = vmul.f32 %v1617, %v1628
      %v1652 = vmul.f32 %v1618, %v1628
      %v1653 = vmul.f32 %v1619, %v1628
      %v1654 = vmul.f32 %v1620, %v1628
      %v1655 = vmul.f32 %v1621, %v1628
      %v1656 = vmul.f32 %v1622, %v1628
      %v1657 = vmul.f32 %v1623, %v1628
      %v1658 = vmul.f32 %v1624, %v1628
      %v1659 = vmul.f32 %v1625, %v1628
      %v1660 = vmul.f32 %v1626, %v1628
      %v1661 = vadd.f32 %v1563, %v1629
      %v1662 = vadd.f32 %v1564, %v1630
      %v1663 = vadd.f32 %v1565, %v1631
      %v1664 = vadd.f32 %v1566, %v1632
      %v1665 = vadd.f32 %v1567, %v1633
      %v1666 = vadd.f32 %v1568, %v1634
      %v1667 = vadd.f32 %v1569, %v1635
      %v1668 = vadd.f32 %v1570, %v1636
      %v1669 = vadd.f32 %v1571, %v1637
      %v1670 = vadd.f32 %v1572, %v1638
      %v1671 = vadd.f32 %v1573, %v1639
      %v1672 = vadd.f32 %v1574, %v1640
      %v1673 = vadd.f32 %v1575, %v1641
      %v1674 = vadd.f32 %v1576, %v1642
      %v1675 = vadd.f32 %v1577, %v1643
      %v1676 = vadd.f32 %v1578, %v1644
      %v1677 = vadd.f32 %v1579, %v1645
      %v1678 = vadd.f32 %v1580, %v1646
      %v1679 = vadd.f32 %v1581, %v1647
      %v1680 = vadd.f32 %v1582, %v1648
      %v1681 = vadd.f32 %v1583, %v1649
      %v1682 = vadd.f32 %v1584, %v1650
      %v1683 = vadd.f32 %v1585, %v1651
      %v1684 = vadd.f32 %v1586, %v1652
      %v1685 = vadd.f32 %v1587, %v1653
      %v1686 = vadd.f32 %v1588, %v1654
      %v1687 = vadd.f32 %v1589, %v1655
      %v1688 = vadd.f32 %v1590, %v1656
      %v1689 = vadd.f32 %v1591, %v1657
      %v1690 = vadd.f32 %v1592, %v1658
      %v1691 = vadd.f32 %v1593, %v1659
      %v1692 = vadd.f32 %v1594, %v1660
      %v1693 = vld [vmem:[%s4] sm:$0x1]
      %v1695 = vperm.slane %v1693, 0
      %v1697 = vadd.f32 %v1661, %v1695
      %v1698 = vadd.f32 %v1662, %v1695
      %v1699 = vadd.f32 %v1663, %v1695
      %v1700 = vadd.f32 %v1664, %v1695
      %v1701 = vadd.f32 %v1665, %v1695
      %v1702 = vadd.f32 %v1666, %v1695
      %v1703 = vadd.f32 %v1667, %v1695
      %v1704 = vadd.f32 %v1668, %v1695
      %v1705 = vadd.f32 %v1669, %v1695
      %v1706 = vadd.f32 %v1670, %v1695
      %v1707 = vadd.f32 %v1671, %v1695
      %v1708 = vadd.f32 %v1672, %v1695
      %v1709 = vadd.f32 %v1673, %v1695
      %v1710 = vadd.f32 %v1674, %v1695
      %v1711 = vadd.f32 %v1675, %v1695
      %v1712 = vadd.f32 %v1676, %v1695
      %v1713 = vadd.f32 %v1677, %v1695
      %v1714 = vadd.f32 %v1678, %v1695
      %v1715 = vadd.f32 %v1679, %v1695
      %v1716 = vadd.f32 %v1680, %v1695
      %v1717 = vadd.f32 %v1681, %v1695
      %v1718 = vadd.f32 %v1682, %v1695
      %v1719 = vadd.f32 %v1683, %v1695
      %v1720 = vadd.f32 %v1684, %v1695
      %v1721 = vadd.f32 %v1685, %v1695
      %v1722 = vadd.f32 %v1686, %v1695
      %v1723 = vadd.f32 %v1687, %v1695
      %v1724 = vadd.f32 %v1688, %v1695
      %v1725 = vadd.f32 %v1689, %v1695
      %v1726 = vadd.f32 %v1690, %v1695
      %v1727 = vadd.f32 %v1691, %v1695
      %v1728 = vadd.f32 %v1692, %v1695
      %v1729 = vmax.f32 %v1697, 0.0
      %v1730 = vmax.f32 %v1698, 0.0
      %v1731 = vmax.f32 %v1699, 0.0
      %v1732 = vmax.f32 %v1700, 0.0
      %v1733 = vmax.f32 %v1701, 0.0
      %v1734 = vmax.f32 %v1702, 0.0
      %v1735 = vmax.f32 %v1703, 0.0
      %v1736 = vmax.f32 %v1704, 0.0
      %v1737 = vmax.f32 %v1705, 0.0
      %v1738 = vmax.f32 %v1706, 0.0
      %v1739 = vmax.f32 %v1707, 0.0
      %v1740 = vmax.f32 %v1708, 0.0
      %v1741 = vmax.f32 %v1709, 0.0
      %v1742 = vmax.f32 %v1710, 0.0
      %v1743 = vmax.f32 %v1711, 0.0
      %v1744 = vmax.f32 %v1712, 0.0
      %v1745 = vmax.f32 %v1713, 0.0
      %v1746 = vmax.f32 %v1714, 0.0
      %v1747 = vmax.f32 %v1715, 0.0
      %v1748 = vmax.f32 %v1716, 0.0
      %v1749 = vmax.f32 %v1717, 0.0
      %v1750 = vmax.f32 %v1718, 0.0
      %v1751 = vmax.f32 %v1719, 0.0
      %v1752 = vmax.f32 %v1720, 0.0
      %v1753 = vmax.f32 %v1721, 0.0
      %v1754 = vmax.f32 %v1722, 0.0
      %v1755 = vmax.f32 %v1723, 0.0
      %v1756 = vmax.f32 %v1724, 0.0
      %v1757 = vmax.f32 %v1725, 0.0
      %v1758 = vmax.f32 %v1726, 0.0
      %v1759 = vmax.f32 %v1727, 0.0
      %v1760 = vmax.f32 %v1728, 0.0
      %v1761 = vmin.f32 %v1729, 6.0
      %v1762 = vmin.f32 %v1730, 6.0
      %v1763 = vmin.f32 %v1731, 6.0
      %v1764 = vmin.f32 %v1732, 6.0
      %v1765 = vmin.f32 %v1733, 6.0
      %v1766 = vmin.f32 %v1734, 6.0
      %v1767 = vmin.f32 %v1735, 6.0
      %v1768 = vmin.f32 %v1736, 6.0
      %v1769 = vmin.f32 %v1737, 6.0
      %v1770 = vmin.f32 %v1738, 6.0
      %v1771 = vmin.f32 %v1739, 6.0
      %v1772 = vmin.f32 %v1740, 6.0
      %v1773 = vmin.f32 %v1741, 6.0
      %v1774 = vmin.f32 %v1742, 6.0
      %v1775 = vmin.f32 %v1743, 6.0
      %v1776 = vmin.f32 %v1744, 6.0
      %v1777 = vmin.f32 %v1745, 6.0
      %v1778 = vmin.f32 %v1746, 6.0
      %v1779 = vmin.f32 %v1747, 6.0
      %v1780 = vmin.f32 %v1748, 6.0
      %v1781 = vmin.f32 %v1749, 6.0
      %v1782 = vmin.f32 %v1750, 6.0
      %v1783 = vmin.f32 %v1751, 6.0
      %v1784 = vmin.f32 %v1752, 6.0
      %v1785 = vmin.f32 %v1753, 6.0
      %v1786 = vmin.f32 %v1754, 6.0
      %v1787 = vmin.f32 %v1755, 6.0
      %v1788 = vmin.f32 %v1756, 6.0
      %v1789 = vmin.f32 %v1757, 6.0
      %v1790 = vmin.f32 %v1758, 6.0
      %v1791 = vmin.f32 %v1759, 6.0
      %v1792 = vmin.f32 %v1760, 6.0
      %v1793 = vpack.c.bf16 %v1762, %v1761
      %v1794 = vpack.c.bf16 %v1764, %v1763
      %v1795 = vpack.c.bf16 %v1766, %v1765
      %v1796 = vpack.c.bf16 %v1768, %v1767
      %v1797 = vpack.c.bf16 %v1770, %v1769
      %v1798 = vpack.c.bf16 %v1772, %v1771
      %v1799 = vpack.c.bf16 %v1774, %v1773
      %v1800 = vpack.c.bf16 %v1776, %v1775
      %v1801 = vpack.c.bf16 %v1778, %v1777
      %v1802 = vpack.c.bf16 %v1780, %v1779
      %v1803 = vpack.c.bf16 %v1782, %v1781
      %v1804 = vpack.c.bf16 %v1784, %v1783
      %v1805 = vpack.c.bf16 %v1786, %v1785
      %v1806 = vpack.c.bf16 %v1788, %v1787
      %v1807 = vpack.c.bf16 %v1790, %v1789
      %v1808 = vpack.c.bf16 %v1792, %v1791
      %v1809 = vld [vmem:[%s5] sm:$0xf]
      %v1810 = vld [vmem:[%s5 + $0x4] sm:$0xf]
      %v1811 = vld [vmem:[%s5 + $0x8] sm:$0xf]
      %v1812 = vld [vmem:[%s5 + $0xc] sm:$0xf]
      %v1813 = vld [vmem:[%s5 + $0x10] sm:$0xf]
      %v1814 = vld [vmem:[%s5 + $0x14] sm:$0xf]
      %v1815 = vld [vmem:[%s5 + $0x18] sm:$0xf]
      %v1816 = vld [vmem:[%s5 + $0x1c] sm:$0xf]
      %v1817 = vld [vmem:[%s5 + $0x20] sm:$0xf]
      %v1818 = vld [vmem:[%s5 + $0x24] sm:$0xf]
      %v1819 = vld [vmem:[%s5 + $0x28] sm:$0xf]
      %v1820 = vld [vmem:[%s5 + $0x2c] sm:$0xf]
      %v1821 = vld [vmem:[%s5 + $0x30] sm:$0xf]
      %v1822 = vld [vmem:[%s5 + $0x34] sm:$0xf]
      %v1823 = vld [vmem:[%s5 + $0x38] sm:$0xf]
      %v1824 = vld [vmem:[%s5 + $0x3c] sm:$0xf]
      %v1825 = vld [vmem:[%s6] sm:$0x1]
      %v1827 = vperm.slane %v1825, 0
      %v1845 = vunpack.c.l.b16 %v1809
      %v1846 = vunpack.c.l.b16 %v1810
      %v1847 = vunpack.c.l.b16 %v1811
      %v1848 = vunpack.c.l.b16 %v1812
      %v1849 = vunpack.c.l.b16 %v1813
      %v1850 = vunpack.c.l.b16 %v1814
      %v1851 = vunpack.c.l.b16 %v1815
      %v1852 = vunpack.c.l.b16 %v1816
      %v1853 = vunpack.c.l.b16 %v1817
      %v1854 = vunpack.c.l.b16 %v1818
      %v1855 = vunpack.c.l.b16 %v1819
      %v1856 = vunpack.c.l.b16 %v1820
      %v1857 = vunpack.c.l.b16 %v1821
      %v1858 = vunpack.c.l.b16 %v1822
      %v1859 = vunpack.c.l.b16 %v1823
      %v1860 = vunpack.c.l.b16 %v1824
      %v1861 = vpack.c.b16 %v1846, %v1845
      %v1862 = vpack.c.b16 %v1848, %v1847
      %v1863 = vpack.c.b16 %v1850, %v1849
      %v1864 = vpack.c.b16 %v1852, %v1851
      %v1865 = vpack.c.b16 %v1854, %v1853
      %v1866 = vpack.c.b16 %v1856, %v1855
      %v1867 = vpack.c.b16 %v1858, %v1857
      %v1868 = vpack.c.b16 %v1860, %v1859
      %1877 = vmatpush.bf16.msra.mxu0 %v1868
      %1878 = vmatpush.bf16.msra.mxu0 %v1867
      %1879 = vmatpush.bf16.msra.mxu0 %v1866
      %1880 = vmatpush.bf16.msra.mxu0 %v1865
      %1881 = vmatpush.bf16.msra.mxu0 %v1864
      %1882 = vmatpush.bf16.msra.mxu0 %v1863
      %1883 = vmatpush.bf16.msra.mxu0 %v1862
      %1884 = vmatpush.bf16.msra.mxu0 %v1861
      %1885 = vmatmul.bf16.gmra.mxu0 %v1793
      %v1886 = vpop.f32.mrf.mxu0
      %v1887 = vadd.f32 %v1827, %v1886
      %v1888 = vpop.f32.mrf.mxu0
      %v1889 = vadd.f32 %v1827, %v1888
      %1890 = vmatmul.bf16.gmra.mxu0 %v1794
      %v1891 = vpop.f32.mrf.mxu0
      %v1892 = vadd.f32 %v1827, %v1891
      %v1893 = vpop.f32.mrf.mxu0
      %v1894 = vadd.f32 %v1827, %v1893
      %1895 = vmatmul.bf16.gmra.mxu0 %v1795
      %v1896 = vpop.f32.mrf.mxu0
      %v1897 = vadd.f32 %v1827, %v1896
      %v1898 = vpop.f32.mrf.mxu0
      %v1899 = vadd.f32 %v1827, %v1898
      %1900 = vmatmul.bf16.gmra.mxu0 %v1796
      %v1901 = vpop.f32.mrf.mxu0
      %v1902 = vadd.f32 %v1827, %v1901
      %v1903 = vpop.f32.mrf.mxu0
      %v1904 = vadd.f32 %v1827, %v1903
      %1905 = vmatmul.bf16.gmra.mxu0 %v1797
      %v1906 = vpop.f32.mrf.mxu0
      %v1907 = vadd.f32 %v1827, %v1906
      %v1908 = vpop.f32.mrf.mxu0
      %v1909 = vadd.f32 %v1827, %v1908
      %1910 = vmatmul.bf16.gmra.mxu0 %v1798
      %v1911 = vpop.f32.mrf.mxu0
      %v1912 = vadd.f32 %v1827, %v1911
      %v1913 = vpop.f32.mrf.mxu0
      %v1914 = vadd.f32 %v1827, %v1913
      %1915 = vmatmul.bf16.gmra.mxu0 %v1799
      %v1916 = vpop.f32.mrf.mxu0
      %v1917 = vadd.f32 %v1827, %v1916
      %v1918 = vpop.f32.mrf.mxu0
      %v1919 = vadd.f32 %v1827, %v1918
      %1920 = vmatmul.bf16.gmra.mxu0 %v1800
      %v1921 = vpop.f32.mrf.mxu0
      %v1922 = vadd.f32 %v1827, %v1921
      %v1923 = vpop.f32.mrf.mxu0
      %v1924 = vadd.f32 %v1827, %v1923
      %1925 = vmatmul.bf16.gmra.mxu0 %v1801
      %v1926 = vpop.f32.mrf.mxu0
      %v1927 = vadd.f32 %v1827, %v1926
      %v1928 = vpop.f32.mrf.mxu0
      %v1929 = vadd.f32 %v1827, %v1928
      %1930 = vmatmul.bf16.gmra.mxu0 %v1802
      %v1931 = vpop.f32.mrf.mxu0
      %v1932 = vadd.f32 %v1827, %v1931
      %v1933 = vpop.f32.mrf.mxu0
      %v1934 = vadd.f32 %v1827, %v1933
      %1935 = vmatmul.bf16.gmra.mxu0 %v1803
      %v1936 = vpop.f32.mrf.mxu0
      %v1937 = vadd.f32 %v1827, %v1936
      %v1938 = vpop.f32.mrf.mxu0
      %v1939 = vadd.f32 %v1827, %v1938
      %1940 = vmatmul.bf16.gmra.mxu0 %v1804
      %v1941 = vpop.f32.mrf.mxu0
      %v1942 = vadd.f32 %v1827, %v1941
      %v1943 = vpop.f32.mrf.mxu0
      %v1944 = vadd.f32 %v1827, %v1943
      %1945 = vmatmul.bf16.gmra.mxu0 %v1805
      %v1946 = vpop.f32.mrf.mxu0
      %v1947 = vadd.f32 %v1827, %v1946
      %v1948 = vpop.f32.mrf.mxu0
      %v1949 = vadd.f32 %v1827, %v1948
      %1950 = vmatmul.bf16.gmra.mxu0 %v1806
      %v1951 = vpop.f32.mrf.mxu0
      %v1952 = vadd.f32 %v1827, %v1951
      %v1953 = vpop.f32.mrf.mxu0
      %v1954 = vadd.f32 %v1827, %v1953
      %1955 = vmatmul.bf16.gmra.mxu0 %v1807
      %v1956 = vpop.f32.mrf.mxu0
      %v1957 = vadd.f32 %v1827, %v1956
      %v1958 = vpop.f32.mrf.mxu0
      %v1959 = vadd.f32 %v1827, %v1958
      %1960 = vmatmul.bf16.gmra.mxu0 %v1808
      %v1961 = vpop.f32.mrf.mxu0
      %v1962 = vadd.f32 %v1827, %v1961
      %v1963 = vpop.f32.mrf.mxu0
      %v1964 = vadd.f32 %v1827, %v1963
      %1965 = vdwg.mxu0
      %s1966 = sadd.s32 %s302, 1
      %s1967 = smul.u32 %s1966, 24
      %s1968 = scalar_lea.vmem %s291, %s1967
      %v1969 = vld [vmem:[%s1968 + $0x1] sm:$0xff]
      %v1970 = vld [vmem:[%s1968 + $0x9] sm:$0xff]
      %v1971 = vld [vmem:[%s1968 + $0x19] sm:$0xff]
      %v1972 = vld [vmem:[%s1968 + $0x21] sm:$0xff]
      %v1973 = vld [vmem:[%s1968 + $0x31] sm:$0xff]
      %v1974 = vld [vmem:[%s1968 + $0x39] sm:$0xff]
      %v1975 = vld [vmem:[%s1968 + $0x49] sm:$0xff]
      %v1976 = vld [vmem:[%s1968 + $0x51] sm:$0xff]
      %v1977 = vld [vmem:[%s1968 + $0x61] sm:$0xff]
      %v1978 = vld [vmem:[%s1968 + $0x69] sm:$0xff]
      %v1979 = vld [vmem:[%s1968 + $0x79] sm:$0xff]
      %v1980 = vld [vmem:[%s1968 + $0x81] sm:$0xff]
      %v1981 = vld [vmem:[%s1968 + $0x91] sm:$0xff]
      %v1982 = vld [vmem:[%s1968 + $0x99] sm:$0xff]
      %v1983 = vld [vmem:[%s1968 + $0xa9] sm:$0xff]
      %v1984 = vld [vmem:[%s1968 + $0xb1] sm:$0xff]
      %v1985 = vld [vmem:[%s1968 + $0xc1] sm:$0xff]
      %v1986 = vld [vmem:[%s1968 + $0xc9] sm:$0xff]
      %v1987 = vld [vmem:[%s1968 + $0xd9] sm:$0xff]
      %v1988 = vld [vmem:[%s1968 + $0xe1] sm:$0xff]
      %v1989 = vld [vmem:[%s1968 + $0xf1] sm:$0xff]
      %v1990 = vld [vmem:[%s1968 + $0xf9] sm:$0xff]
      %v1991 = vld [vmem:[%s1968 + $0x109] sm:$0xff]
      %v1992 = vld [vmem:[%s1968 + $0x111] sm:$0xff]
      %v1993 = vld [vmem:[%s1968 + $0x121] sm:$0xff]
      %v1994 = vld [vmem:[%s1968 + $0x129] sm:$0xff]
      %v1995 = vld [vmem:[%s1968 + $0x139] sm:$0xff]
      %v1996 = vld [vmem:[%s1968 + $0x141] sm:$0xff]
      %v1997 = vld [vmem:[%s1968 + $0x151] sm:$0xff]
      %v1998 = vld [vmem:[%s1968 + $0x159] sm:$0xff]
      %v1999 = vld [vmem:[%s1968 + $0x169] sm:$0xff]
      %v2000 = vld [vmem:[%s1968 + $0x171] sm:$0xff]
      %v2001 = vadd.f32 %v1887, %v1969
      %v2002 = vadd.f32 %v1889, %v1970
      %v2003 = vadd.f32 %v1892, %v1971
      %v2004 = vadd.f32 %v1894, %v1972
      %v2005 = vadd.f32 %v1897, %v1973
      %v2006 = vadd.f32 %v1899, %v1974
      %v2007 = vadd.f32 %v1902, %v1975
      %v2008 = vadd.f32 %v1904, %v1976
      %v2009 = vadd.f32 %v1907, %v1977
      %v2010 = vadd.f32 %v1909, %v1978
      %v2011 = vadd.f32 %v1912, %v1979
      %v2012 = vadd.f32 %v1914, %v1980
      %v2013 = vadd.f32 %v1917, %v1981
      %v2014 = vadd.f32 %v1919, %v1982
      %v2015 = vadd.f32 %v1922, %v1983
      %v2016 = vadd.f32 %v1924, %v1984
      %v2017 = vadd.f32 %v1927, %v1985
      %v2018 = vadd.f32 %v1929, %v1986
      %v2019 = vadd.f32 %v1932, %v1987
      %v2020 = vadd.f32 %v1934, %v1988
      %v2021 = vadd.f32 %v1937, %v1989
      %v2022 = vadd.f32 %v1939, %v1990
      %v2023 = vadd.f32 %v1942, %v1991
      %v2024 = vadd.f32 %v1944, %v1992
      %v2025 = vadd.f32 %v1947, %v1993
      %v2026 = vadd.f32 %v1949, %v1994
      %v2027 = vadd.f32 %v1952, %v1995
      %v2028 = vadd.f32 %v1954, %v1996
      %v2029 = vadd.f32 %v1957, %v1997
      %v2030 = vadd.f32 %v1959, %v1998
      %v2031 = vadd.f32 %v1962, %v1999
      %v2032 = vadd.f32 %v1964, %v2000
      %2033 = vst [vmem:[%s300] sm:$0xff] %v2001
      %2034 = vst [vmem:[%s300 + $0x8] sm:$0xff] %v2002
      %2035 = vst [vmem:[%s300 + $0x10] sm:$0xff] %v2003
      %2036 = vst [vmem:[%s300 + $0x18] sm:$0xff] %v2004
      %2037 = vst [vmem:[%s300 + $0x20] sm:$0xff] %v2005
      %2038 = vst [vmem:[%s300 + $0x28] sm:$0xff] %v2006
      %2039 = vst [vmem:[%s300 + $0x30] sm:$0xff] %v2007
      %2040 = vst [vmem:[%s300 + $0x38] sm:$0xff] %v2008
      %2041 = vst [vmem:[%s300 + $0x40] sm:$0xff] %v2009
      %2042 = vst [vmem:[%s300 + $0x48] sm:$0xff] %v2010
      %2043 = vst [vmem:[%s300 + $0x50] sm:$0xff] %v2011
      %2044 = vst [vmem:[%s300 + $0x58] sm:$0xff] %v2012
      %2045 = vst [vmem:[%s300 + $0x60] sm:$0xff] %v2013
      %2046 = vst [vmem:[%s300 + $0x68] sm:$0xff] %v2014
      %2047 = vst [vmem:[%s300 + $0x70] sm:$0xff] %v2015
      %2048 = vst [vmem:[%s300 + $0x78] sm:$0xff] %v2016
      %2049 = vst [vmem:[%s300 + $0x80] sm:$0xff] %v2017
      %2050 = vst [vmem:[%s300 + $0x88] sm:$0xff] %v2018
      %2051 = vst [vmem:[%s300 + $0x90] sm:$0xff] %v2019
      %2052 = vst [vmem:[%s300 + $0x98] sm:$0xff] %v2020
      %2053 = vst [vmem:[%s300 + $0xa0] sm:$0xff] %v2021
      %2054 = vst [vmem:[%s300 + $0xa8] sm:$0xff] %v2022
      %2055 = vst [vmem:[%s300 + $0xb0] sm:$0xff] %v2023
      %2056 = vst [vmem:[%s300 + $0xb8] sm:$0xff] %v2024
      %2057 = vst [vmem:[%s300 + $0xc0] sm:$0xff] %v2025
      %2058 = vst [vmem:[%s300 + $0xc8] sm:$0xff] %v2026
      %2059 = vst [vmem:[%s300 + $0xd0] sm:$0xff] %v2027
      %2060 = vst [vmem:[%s300 + $0xd8] sm:$0xff] %v2028
      %2061 = vst [vmem:[%s300 + $0xe0] sm:$0xff] %v2029
      %2062 = vst [vmem:[%s300 + $0xe8] sm:$0xff] %v2030
      %2063 = vst [vmem:[%s300 + $0xf0] sm:$0xff] %v2031
      %2064 = vst [vmem:[%s300 + $0xf8] sm:$0xff] %v2032
      %s2065 = smul.u32 32, %s23
      %p2066 = scmp.lt.s32.totalorder %s22, 1
      %s2067 = scalar_select %p2066, %s22, 1
      %p2068 = scmp.lt.s32.totalorder %s2065, 31
      %s2069 = scalar_select %p2068, %s2065, 31
      %s2070 = smul.addr %s2067, 32
      %s2071 = sadd.s32 %s2069, %s2070
      %s2072 = smul.addr %s2071, 8
      %s2073 = scalar_lea.vmem %s7, %s2072
      // Predicated region
      $region53: #{linear_bottleneck_forward.1} parent=47 // pred_check
        %p2074 = pneg %p202
      $region54: #{linear_bottleneck_forward.1} parent=47 // pred_check_branch
        %2076 = sbr.rel (%p2074) target = $region56
      $region55: #{linear_bottleneck_forward.1} parent=47 // pred_region
        %s2077 = smul.u32 32, %s23
      $region56: #{linear_bottleneck_forward.1} parent=47 // pred_fallthru
        _
    $region48: #{linear_bottleneck_forward.1} parent=5 // pred_fallthru
      _
    %p2078 = scmp.le.s32.totalorder 2, %s13
    // Predicated region
    $region57: #{linear_bottleneck_forward.1} parent=5 // pred_check
      %p2079 = pneg %p2078
    $region58: #{linear_bottleneck_forward.1} parent=5 // pred_check_branch
      %2081 = sbr.rel (%p2079) target = $region60
    $region59: #{linear_bottleneck_forward.1} parent=5 // pred_region
      %s2082 = ssub.s32 %s13, 2
      // Predicated region
      $region61: #{linear_bottleneck_forward.1} parent=59 // pred_check
        %p2083 = pneg %p208
      $region62: #{linear_bottleneck_forward.1} parent=59 // pred_check_branch
        %2085 = sbr.rel (%p2083) target = $region64
      $region63: #{linear_bottleneck_forward.1} parent=59 // pred_region
        %s2086 = smul.u32 32, %s25
        %p2087 = scmp.lt.s32.totalorder %s24, 1
        %s2088 = scalar_select %p2087, %s24, 1
        %p2089 = scmp.lt.s32.totalorder %s2086, 31
        %s2090 = scalar_select %p2089, %s2086, 31
        %s2091 = smul.addr %s2088, 32
        %s2092 = sadd.s32 %s2090, %s2091
        %s2093 = smul.addr %s2092, 8
        %s2094 = scalar_lea.vmem %s7, %s2093
      $region64: #{linear_bottleneck_forward.1} parent=59 // pred_fallthru
        _
    $region60: #{linear_bottleneck_forward.1} parent=5 // pred_fallthru
      _
  $region6: #{linear_bottleneck_forward.1} parent=0 // loop_footer
    %s17 = sadd.s32 1, %s13
  $region7: #{linear_bottleneck_forward.1} parent=0 // loop_footer_branch
    %12 = sbr.rel target = $region3
  $region8: #{linear_bottleneck_forward.1} parent=0 // loop_exit
    _

</llo_original>
